<compile_context>
chip_gen: v7x
topology: tpu7x:2x2x1
jax: 0.10.0
libtpu: 0.0.40
codegen_flags: <defaults>
</compile_context>

<pallas_src>
import jax
import jax.numpy as jnp
from jax import lax
from jax.experimental import pallas as pl
from jax.experimental.pallas import tpu as pltpu

DIM = 128                          # "dimension" = len(features)
D2, D4, D8, D16 = DIM // 2, DIM // 4, DIM // 8, DIM // 16
TILE_B = 1024                      # batch rows per grid step (batch on lanes)
BATCH = 2048                       # example batch -> grid = (2,) (even, >=2)

# Row offsets of each layer inside the packed weight/bias slabs.
_OFF1 = 0                          # layer 1 rows [  0:  64)
_OFF2 = D2                         # layer 2 rows [ 64:  96)
_OFF3 = D2 + D4                    # layer 3 rows [ 96: 112)
_OFF4 = D2 + D4 + D8               # layer 4 rows [112: 120)
_ROWS = 128                        # padded slab row count (16-aligned for bf16)


def discriminator_kernel(x_ref, w_ref, b_ref, oT_ref):
    """Fused 4-layer MLP forward for one batch tile, batch on the lane axis.

    x_ref : [tile_b, DIM]  f32   (pipelined HBM tile; cast to bf16 in-kernel)
    w_ref : [_ROWS, DIM]   bf16  (VMEM-resident packed weights, PyTorch [out,in])
    b_ref : [_ROWS, 1]     f32   (VMEM-resident packed biases)
    oT_ref: [D16, tile_b]  f32   (lane-dense output slab)
    """
    x = x_ref[...].astype(jnp.bfloat16)                           # [tb, 128]

    # Layer 1: 128 -> 64.  Contract over DIM with rhs-transposed dot_general so
    # the MXU result lands directly in batch-on-lanes layout [64, tb]
    # (no wrapper/XLU transpose of x needed).
    h = lax.dot_general(w_ref[_OFF1:_OFF2, 0:DIM], x,
                        dimension_numbers=(((1,), (1,)), ((), ())),
                        preferred_element_type=jnp.float32)
    h = jnp.maximum(h + b_ref[_OFF1:_OFF2, :], 0.0)               # bias + ReLU (f32)
    # Dropout(0.3): identity at inference.

    # Layer 2: 64 -> 32
    h = jnp.dot(w_ref[_OFF2:_OFF3, 0:D2], h.astype(jnp.bfloat16),
                preferred_element_type=jnp.float32)
    h = jnp.maximum(h + b_ref[_OFF2:_OFF3, :], 0.0)

    # Layer 3: 32 -> 16
    h = jnp.dot(w_ref[_OFF3:_OFF4, 0:D4], h.astype(jnp.bfloat16),
                preferred_element_type=jnp.float32)
    h = jnp.maximum(h + b_ref[_OFF3:_OFF4, :], 0.0)

    # Layer 4: 16 -> 8, final ReLU
    h = jnp.dot(w_ref[_OFF4:_OFF4 + D16, 0:D8], h.astype(jnp.bfloat16),
                preferred_element_type=jnp.float32)
    h = jnp.maximum(h + b_ref[_OFF4:_OFF4 + D16, :], 0.0)

    oT_ref[...] = h.astype(oT_ref.dtype)                          # [8, tb] unmasked vst


def _round_up(n, m):
    return (n + m - 1) // m * m


@jax.jit
def discriminator_forward_lanes(x, w_slab, b_slab):
    """x: [batch, DIM] f32 -> [D16, batch] f32 (lane-dense, batch on lanes)."""
    batch = x.shape[0]
    tile_b = min(TILE_B, _round_up(batch, 128))
    batch_p = _round_up(batch, tile_b)
    if batch_p != batch:
        # TODO(synk): a pl.when-guarded masked tail tile would avoid this copy;
        # production callers should pick batch % TILE_B == 0 (the demo does).
        x = jnp.pad(x, ((0, batch_p - batch), (0, 0)))

    grid = (batch_p // tile_b,)
    vmem_resident = pl.BlockSpec(memory_space=pltpu.MemorySpace.VMEM)

    outT = pl.pallas_call(
        discriminator_kernel,
        out_shape=jax.ShapeDtypeStruct((D16, batch_p), jnp.float32),
        grid_spec=pltpu.PrefetchScalarGridSpec(
            num_scalar_prefetch=0,
            grid=grid,
            in_specs=[
                pl.BlockSpec((tile_b, DIM), lambda i: (i, 0)),    # x tile (pipelined)
                vmem_resident,                                    # packed bf16 weights
                vmem_resident,                                    # packed f32 biases
            ],
            out_specs=pl.BlockSpec((D16, tile_b), lambda i: (0, i)),
        ),
        compiler_params=pltpu.CompilerParams(
            dimension_semantics=("parallel",)),
    )(x, w_slab, b_slab)

    return outT[:, :batch]


def discriminator_forward(x, w_slab, b_slab):
    """PyTorch-layout convenience wrapper: [batch, D16].

    The transpose is a tiny standalone XLA op; performance-critical consumers
    should fuse against discriminator_forward_lanes' [D16, batch] slab instead.
    """
    return discriminator_forward_lanes(x, w_slab, b_slab).T


def init_linear(key, fan_in, fan_out):
    """Mirror PyTorch nn.Linear default init: uniform(+-1/sqrt(fan_in)).

    Weight stored [out, in] (PyTorch layout), bias [out].
    """
    kw, kb = jax.random.split(key)
    bound = 1.0 / jnp.sqrt(jnp.float32(fan_in))
    w = jax.random.uniform(kw, (fan_out, fan_in), jnp.float32, -bound, bound)
    b = jax.random.uniform(kb, (fan_out,), jnp.float32, -bound, bound)
    return w, b


def pack_params(params):
    """Pack 4 layers into one bf16 weight slab + one f32 bias slab (done once)."""
    (w1, b1), (w2, b2), (w3, b3), (w4, b4) = params
    w_slab = jnp.zeros((_ROWS, DIM), jnp.bfloat16)
    w_slab = w_slab.at[_OFF1:_OFF2, 0:DIM].set(w1.astype(jnp.bfloat16))
    w_slab = w_slab.at[_OFF2:_OFF3, 0:D2].set(w2.astype(jnp.bfloat16))
    w_slab = w_slab.at[_OFF3:_OFF4, 0:D4].set(w3.astype(jnp.bfloat16))
    w_slab = w_slab.at[_OFF4:_OFF4 + D16, 0:D8].set(w4.astype(jnp.bfloat16))

    b_slab = jnp.zeros((_ROWS, 1), jnp.float32)
    b_slab = b_slab.at[_OFF1:_OFF2, 0].set(b1)
    b_slab = b_slab.at[_OFF2:_OFF3, 0].set(b2)
    b_slab = b_slab.at[_OFF3:_OFF4, 0].set(b3)
    b_slab = b_slab.at[_OFF4:_OFF4 + D16, 0].set(b4)
    return w_slab, b_slab


def reference_forward(x, params):
    """Pure-JAX reference with the same bf16-operand / f32-accumulate math."""
    h = x
    for (w, b) in params:
        h = jnp.dot(h.astype(jnp.bfloat16), w.T.astype(jnp.bfloat16),
                    preferred_element_type=jnp.float32) + b.reshape(1, -1)
        h = jnp.maximum(h, 0.0)     # ReLU after every layer (incl. the last)
    return h


if __name__ == "__main__":
    key = jax.random.PRNGKey(0)
    kx, k1, k2, k3, k4 = jax.random.split(key, 5)

    params = (
        init_linear(k1, DIM, D2),    # 128 -> 64
        init_linear(k2, D2, D4),     # 64  -> 32
        init_linear(k3, D4, D8),     # 32  -> 16
        init_linear(k4, D8, D16),    # 16  -> 8
    )
    w_slab, b_slab = pack_params(params)
    x = jax.random.normal(kx, (BATCH, DIM), jnp.float32)

    out = discriminator_forward(x, w_slab, b_slab)
    out = jax.block_until_ready(out)

    ref = reference_forward(x, params)
    assert out.shape == (BATCH, D16)
    assert jnp.allclose(out, ref, atol=1e-3, rtol=1e-3), "mismatch vs reference"

    print("KERNEL_OK")
</pallas_src>

<mosaic_0001>
module attributes {stable_mosaic.version = 11 : i64} {
  func.func @discriminator_kernel(%arg0: i32, %arg1: memref<1024x128xf32, #tpu.memory_space<vmem>>, %arg2: memref<128x128xbf16, #tpu.memory_space<vmem>>, %arg3: memref<128x1xf32, #tpu.memory_space<vmem>>, %arg4: memref<8x1024xf32, #tpu.memory_space<vmem>>) attributes {dimension_semantics = [#tpu.dimension_semantics<parallel>], iteration_bounds = array<i64: 2>, scalar_prefetch = 0 : i64, scratch_operands = 0 : i64, tpu.core_type = #tpu.core_type<tc>, window_params = [{transform_indices = @transform_0, window_bounds = array<i64: 1024, 128>}, {pipeline_mode = #tpu.pipeline_mode<synchronous>, transform_indices = @transform_1, window_bounds = array<i64: 128, 128>}, {pipeline_mode = #tpu.pipeline_mode<synchronous>, transform_indices = @transform_2, window_bounds = array<i64: 128, 1>}, {transform_indices = @transform_3, window_bounds = array<i64: 8, 1024>}]} {
    %c0 = arith.constant 0 : index
    %c0_0 = arith.constant 0 : index
    %0 = vector.load %arg1[%c0, %c0_0] : memref<1024x128xf32, #tpu.memory_space<vmem>>, vector<1024x128xf32>
    %1 = arith.truncf %0 : vector<1024x128xf32> to vector<1024x128xbf16>
    %c0_1 = arith.constant 0 : index
    %c0_2 = arith.constant 0 : index
    %2 = vector.load %arg2[%c0_1, %c0_2] : memref<128x128xbf16, #tpu.memory_space<vmem>>, vector<64x128xbf16>
    %cst = arith.constant dense<0.000000e+00> : vector<64x1024xf32>
    %3 = tpu.matmul %2, %1, %cst {dimension_numbers = #tpu.dot_dimension_numbers<[1], [1], [0], [0], [0, 0, 1, 0], [], []>} : vector<64x128xbf16>, vector<1024x128xbf16>, vector<64x1024xf32> -> vector<64x1024xf32>
    %c0_3 = arith.constant 0 : index
    %c0_4 = arith.constant 0 : index
    %4 = vector.load %arg3[%c0_3, %c0_4] : memref<128x1xf32, #tpu.memory_space<vmem>>, vector<64x1xf32>
    %5 = vector.broadcast %4 : vector<64x1xf32> to vector<64x1024xf32>
    %6 = arith.addf %3, %5 : vector<64x1024xf32>
    %cst_5 = arith.constant 0.000000e+00 : f32
    %7 = vector.broadcast %cst_5 : f32 to vector<64x1024xf32>
    %8 = arith.maximumf %6, %7 : vector<64x1024xf32>
    %c64 = arith.constant 64 : index
    %c0_6 = arith.constant 0 : index
    %9 = vector.load %arg2[%c64, %c0_6] : memref<128x128xbf16, #tpu.memory_space<vmem>>, vector<32x64xbf16>
    %10 = arith.truncf %8 : vector<64x1024xf32> to vector<64x1024xbf16>
    %cst_7 = arith.constant dense<0.000000e+00> : vector<32x1024xf32>
    %11 = tpu.matmul %9, %10, %cst_7 {dimension_numbers = #tpu.dot_dimension_numbers<[1], [0], [0], [1], [0, 0, 1, 1], [], []>} : vector<32x64xbf16>, vector<64x1024xbf16>, vector<32x1024xf32> -> vector<32x1024xf32>
    %c64_8 = arith.constant 64 : index
    %c0_9 = arith.constant 0 : index
    %12 = vector.load %arg3[%c64_8, %c0_9] : memref<128x1xf32, #tpu.memory_space<vmem>>, vector<32x1xf32>
    %13 = vector.broadcast %12 : vector<32x1xf32> to vector<32x1024xf32>
    %14 = arith.addf %11, %13 : vector<32x1024xf32>
    %cst_10 = arith.constant 0.000000e+00 : f32
    %15 = vector.broadcast %cst_10 : f32 to vector<32x1024xf32>
    %16 = arith.maximumf %14, %15 : vector<32x1024xf32>
    %c96 = arith.constant 96 : index
    %c0_11 = arith.constant 0 : index
    %17 = vector.load %arg2[%c96, %c0_11] : memref<128x128xbf16, #tpu.memory_space<vmem>>, vector<16x32xbf16>
    %18 = arith.truncf %16 : vector<32x1024xf32> to vector<32x1024xbf16>
    %cst_12 = arith.constant dense<0.000000e+00> : vector<16x1024xf32>
    %19 = tpu.matmul %17, %18, %cst_12 {dimension_numbers = #tpu.dot_dimension_numbers<[1], [0], [0], [1], [0, 0, 1, 1], [], []>} : vector<16x32xbf16>, vector<32x1024xbf16>, vector<16x1024xf32> -> vector<16x1024xf32>
    %c96_13 = arith.constant 96 : index
    %c0_14 = arith.constant 0 : index
    %20 = vector.load %arg3[%c96_13, %c0_14] : memref<128x1xf32, #tpu.memory_space<vmem>>, vector<16x1xf32>
    %21 = vector.broadcast %20 : vector<16x1xf32> to vector<16x1024xf32>
    %22 = arith.addf %19, %21 : vector<16x1024xf32>
    %cst_15 = arith.constant 0.000000e+00 : f32
    %23 = vector.broadcast %cst_15 : f32 to vector<16x1024xf32>
    %24 = arith.maximumf %22, %23 : vector<16x1024xf32>
    %c112 = arith.constant 112 : index
    %c0_16 = arith.constant 0 : index
    %25 = vector.load %arg2[%c112, %c0_16] : memref<128x128xbf16, #tpu.memory_space<vmem>>, vector<8x16xbf16>
    %26 = arith.truncf %24 : vector<16x1024xf32> to vector<16x1024xbf16>
    %cst_17 = arith.constant dense<0.000000e+00> : vector<8x1024xf32>
    %27 = tpu.matmul %25, %26, %cst_17 {dimension_numbers = #tpu.dot_dimension_numbers<[1], [0], [0], [1], [0, 0, 1, 1], [], []>} : vector<8x16xbf16>, vector<16x1024xbf16>, vector<8x1024xf32> -> vector<8x1024xf32>
    %c112_18 = arith.constant 112 : index
    %c0_19 = arith.constant 0 : index
    %28 = vector.load %arg3[%c112_18, %c0_19] : memref<128x1xf32, #tpu.memory_space<vmem>>, vector<8x1xf32>
    %29 = vector.broadcast %28 : vector<8x1xf32> to vector<8x1024xf32>
    %30 = arith.addf %27, %29 : vector<8x1024xf32>
    %cst_20 = arith.constant 0.000000e+00 : f32
    %31 = vector.broadcast %cst_20 : f32 to vector<8x1024xf32>
    %32 = arith.maximumf %30, %31 : vector<8x1024xf32>
    %c0_21 = arith.constant 0 : index
    %c0_22 = arith.constant 0 : index
    %33 = vector.load %arg4[%c0_21, %c0_22] : memref<8x1024xf32, #tpu.memory_space<vmem>>, vector<8x1024xf32>
    tpu.vector_store %arg4[%c0_21, %c0_22], %32 {strides = array<i32>} : memref<8x1024xf32, #tpu.memory_space<vmem>>, vector<8x1024xf32>,
    return
  }
  func.func @transform_0(%arg0: i32) -> (i32, i32) {
    %c0_i32 = arith.constant 0 : i32
    %c0_i32_0 = arith.constant 0 : i32
    return %arg0, %c0_i32 : i32, i32
  }
  func.func @transform_1(%arg0: i32) -> (i32, i32) {
    %c0_i32 = arith.constant 0 : i32
    %c0_i32_0 = arith.constant 0 : i32
    %c0_i32_1 = arith.constant 0 : i32
    return %c0_i32, %c0_i32_0 : i32, i32
  }
  func.func @transform_2(%arg0: i32) -> (i32, i32) {
    %c0_i32 = arith.constant 0 : i32
    %c0_i32_0 = arith.constant 0 : i32
    %c0_i32_1 = arith.constant 0 : i32
    return %c0_i32, %c0_i32_0 : i32, i32
  }
  func.func @transform_3(%arg0: i32) -> (i32, i32) {
    %c0_i32 = arith.constant 0 : i32
    %c0_i32_0 = arith.constant 0 : i32
    return %c0_i32, %arg0 : i32, i32
  }
}

</mosaic_0001>

<llo_original>
// kernel: discriminator_forward_lanes.1
$region0: #{discriminator_forward_lanes.1}
  #allocation0 [shape = 'u32[]', space=smem, size = 0x4, offset = 0x4, fixed_abs, tag = 'smem constant byte address 0x4 - core index']
  #allocation1 [shape = 'u32[144,128]{1,0:T(1,128)}', space=vmem, size = 0x12000, scoped, tag = 'internal scratch']
  %s0 = inlined_call_operand.hbm [shape: f32[2048,128], index: 0, kind: input, shape index: {}]
  %s1 = inlined_call_operand.vmem [shape: bf16[128,128], index: 1, kind: input, shape index: {}]
  %s2 = inlined_call_operand.vmem [shape: f32[128,1], index: 2, kind: input, shape index: {}]
  %s3 = inlined_call_operand.hbm [shape: f32[8,2048], index: 3, kind: output, shape index: {}]
  %s4 = sld [smem:[#allocation0]]
  $region49: #{discriminator_forward_lanes.1} parent=0
    _
  %s6 = ssub.s32 1, %s4
  %s7 = scalar_select 0, %s6, %s4
  $region1: #{discriminator_forward_lanes.1} parent=0
    #allocation2 [shape = 'u8[1048576]{0}', space=vmem, size = 0x100000, scoped, tag = 'input window, operand 0']
    #allocation3 [shape = 's32[2]{0}', space=sflag, size = 0x8, scoped, tag = 'scoped memory for discriminator_forward_lanes.1']
    #allocation4 [shape = 's32[2]{0}', space=sflag, size = 0x8, scoped, tag = 'scoped memory for discriminator_forward_lanes.1']
    #allocation5 [shape = 'u8[65536]{0}', space=vmem, size = 0x10000, scoped, tag = 'output window, operand 0']
    %8 = vsyncpa [#allocation3], 0
    %s9 = scalar_lea.sflag [#allocation3], 1
    %10 = vsyncpa %s9, 0
    %11 = vsyncpa [#allocation4], 0
    %s12 = scalar_lea.sflag [#allocation4], 1
    %13 = vsyncpa %s12, 0
    loop: start=0, step=1, limit=4
    $region2: #{discriminator_forward_lanes.1} parent=1 // loop_pre_header
      _
    $region3: #{discriminator_forward_lanes.1} parent=1 // loop_header
      %s15 = sphi 0, %s19
      %p16 = scmp.ge.s32.totalorder %s15, 4
      %s25 = sphi 0, %s27
      %s28 = sphi 0, %s25
      %s29 = sphi 0, %s28
      %s45 = sphi 0, %s29
      %s49 = sphi 0, %s49
      %s51 = sphi 0, %s49
      %s52 = sphi 0, %s51
      %s66 = sphi 0, %s52
      %s70 = sphi 0, %s70
      %s72 = sphi 0, %s70
      %s73 = sphi 0, %s72
      %s87 = sphi 0, %s73
      %s93 = sphi 0, %s95
      %s96 = sphi 0, %s93
      %s97 = sphi 0, %s96
      %s113 = sphi 0, %s97
    $region4: #{discriminator_forward_lanes.1} parent=1 // loop_header_branch
      %18 = sbr.rel (%p16) target = $region8
    $region5: #{discriminator_forward_lanes.1} parent=1 // loop_body
      %s20 = ssub.s32 %s15, 1
      %s21 = ssub.s32 %s15, 2
      %s22 = sadd.s32 %s15, 1
      %s23 = ssub.s32 %s15, %s22
      %p24 = scmp.eq.s32.totalorder %s23, 0
      %s26 = sadd.s32 %s25, 1
      %s27 = scalar_select %p24, %s25, %s26
      %p30 = pneg %p24
      %p31 = scmp.eq.s32.totalorder %s15, 1
      %p32 = por %p30, %p31
      %p33 = scmp.ne.s32.totalorder %s25, %s28
      %p34 = scmp.eq.s32.totalorder %s15, 0
      %p35 = por %p33, %p34
      %p36 = scmp.ne.s32.totalorder %s25, %s28
      %p37 = scmp.eq.s32.totalorder %s20, 1
      %p38 = por %p36, %p37
      %p39 = scmp.ne.s32.totalorder %s28, %s29
      %p40 = scmp.eq.s32.totalorder %s20, 0
      %p41 = por %p39, %p40
      %p42 = scmp.ne.s32.totalorder %s28, %s29
      %p43 = scmp.eq.s32.totalorder %s21, 1
      %p44 = por %p42, %p43
      %p46 = scmp.ne.s32.totalorder %s29, %s45
      %p47 = scmp.eq.s32.totalorder %s21, 0
      %p48 = por %p46, %p47
      %s50 = sadd.s32 %s49, 1
      %p53 = scmp.eq.s32.totalorder %s15, 1
      %p54 = scmp.ne.s32.totalorder %s49, %s51
      %p55 = scmp.eq.s32.totalorder %s15, 0
      %p56 = por %p54, %p55
      %p57 = scmp.ne.s32.totalorder %s49, %s51
      %p58 = scmp.eq.s32.totalorder %s20, 1
      %p59 = por %p57, %p58
      %p60 = scmp.ne.s32.totalorder %s51, %s52
      %p61 = scmp.eq.s32.totalorder %s20, 0
      %p62 = por %p60, %p61
      %p63 = scmp.ne.s32.totalorder %s51, %s52
      %p64 = scmp.eq.s32.totalorder %s21, 1
      %p65 = por %p63, %p64
      %p67 = scmp.ne.s32.totalorder %s52, %s66
      %p68 = scmp.eq.s32.totalorder %s21, 0
      %p69 = por %p67, %p68
      %s71 = sadd.s32 %s70, 1
      %p74 = scmp.eq.s32.totalorder %s15, 1
      %p75 = scmp.ne.s32.totalorder %s70, %s72
      %p76 = scmp.eq.s32.totalorder %s15, 0
      %p77 = por %p75, %p76
      %p78 = scmp.ne.s32.totalorder %s70, %s72
      %p79 = scmp.eq.s32.totalorder %s20, 1
      %p80 = por %p78, %p79
      %p81 = scmp.ne.s32.totalorder %s72, %s73
      %p82 = scmp.eq.s32.totalorder %s20, 0
      %p83 = por %p81, %p82
      %p84 = scmp.ne.s32.totalorder %s72, %s73
      %p85 = scmp.eq.s32.totalorder %s21, 1
      %p86 = por %p84, %p85
      %p88 = scmp.ne.s32.totalorder %s73, %s87
      %p89 = scmp.eq.s32.totalorder %s21, 0
      %p90 = por %p88, %p89
      %s91 = ssub.s32 %s15, %s22
      %p92 = scmp.eq.s32.totalorder %s91, 0
      %s94 = sadd.s32 %s93, 1
      %s95 = scalar_select %p92, %s93, %s94
      %p98 = pneg %p92
      %p99 = scmp.eq.s32.totalorder %s15, 1
      %p100 = por %p98, %p99
      %p101 = scmp.ne.s32.totalorder %s93, %s96
      %p102 = scmp.eq.s32.totalorder %s15, 0
      %p103 = por %p101, %p102
      %p104 = scmp.ne.s32.totalorder %s93, %s96
      %p105 = scmp.eq.s32.totalorder %s20, 1
      %p106 = por %p104, %p105
      %p107 = scmp.ne.s32.totalorder %s96, %s97
      %p108 = scmp.eq.s32.totalorder %s20, 0
      %p109 = por %p107, %p108
      %p110 = scmp.ne.s32.totalorder %s96, %s97
      %p111 = scmp.eq.s32.totalorder %s21, 1
      %p112 = por %p110, %p111
      %p114 = scmp.ne.s32.totalorder %s97, %s113
      %p115 = scmp.eq.s32.totalorder %s21, 0
      %p116 = por %p114, %p115
      %p117 = scmp.le.s32.totalorder 1, %s15
      %p118 = scmp.lt.s32.totalorder %s15, 3
      %p119 = pnand %p117, %p118
      %p120 = pneg %p119
      // Predicated region
      $region9: #{discriminator_forward_lanes.1} parent=5 // pred_check
        _
      $region10: #{discriminator_forward_lanes.1} parent=5 // pred_check_branch
        %122 = sbr.rel (%p119) target = $region12
      $region11: #{discriminator_forward_lanes.1} parent=5 // pred_region
        %s123 = ssub.s32 %s15, 1
        // Predicated region
        $region13: #{discriminator_forward_lanes.1} parent=11 // pred_check
          %p124 = pneg %p62
        $region14: #{discriminator_forward_lanes.1} parent=11 // pred_check_branch
          %126 = sbr.rel (%p124) target = $region16
        $region15: #{discriminator_forward_lanes.1} parent=11 // pred_region
          _
        $region16: #{discriminator_forward_lanes.1} parent=11 // pred_fallthru
          _
        // Predicated region
        $region17: #{discriminator_forward_lanes.1} parent=11 // pred_check
          %p127 = pneg %p83
        $region18: #{discriminator_forward_lanes.1} parent=11 // pred_check_branch
          %129 = sbr.rel (%p127) target = $region20
        $region19: #{discriminator_forward_lanes.1} parent=11 // pred_region
          _
        $region20: #{discriminator_forward_lanes.1} parent=11 // pred_fallthru
          _
      $region12: #{discriminator_forward_lanes.1} parent=5 // pred_fallthru
        _
      %p130 = scmp.lt.s32.totalorder %s15, 2
      // Predicated region
      $region21: #{discriminator_forward_lanes.1} parent=5 // pred_check
        %p131 = pneg %p130
      $region22: #{discriminator_forward_lanes.1} parent=5 // pred_check_branch
        %133 = sbr.rel (%p131) target = $region24
      $region23: #{discriminator_forward_lanes.1} parent=5 // pred_region
        // Predicated region
        $region25: #{discriminator_forward_lanes.1} parent=23 // pred_check
          %p134 = pneg %p35
        $region26: #{discriminator_forward_lanes.1} parent=23 // pred_check_branch
          %136 = sbr.rel (%p134) target = $region28
        $region27: #{discriminator_forward_lanes.1} parent=23 // pred_region
          %s137 = sand.u32 %s25, 1
          %s138 = scalar_lea.sflag [#allocation3], %s137
          %s139 = sand.u32 %s25, 1
          %s140 = smul.addr %s139, 1024
          %s141 = scalar_lea.vmem [#allocation2], %s140
          %s142 = smul.u32 128, %s15
          %s144 = ssub.s32 16384, 16384
          %145 = vsyncadd %s138, %s144
          %s146 = smul.addr %s142, 128
          %s147 = scalar_lea.hbm %s0, %s146
          %s148 = sshll.u32 %s141, 4
          %s149 = int_to_ptr.vmem [resolvable:$true] %s148
          %154 = dma.hbm_to_vmem [thread:$0]  %s147, 16384, %s149, %s138, 128, 128, 8
        $region28: #{discriminator_forward_lanes.1} parent=23 // pred_fallthru
          _
      $region24: #{discriminator_forward_lanes.1} parent=5 // pred_fallthru
        _
      %p155 = scmp.le.s32.totalorder 1, %s15
      %p156 = scmp.lt.s32.totalorder %s15, 3
      %p157 = pnand %p155, %p156
      %p158 = pneg %p157
      // Predicated region
      $region29: #{discriminator_forward_lanes.1} parent=5 // pred_check
        _
      $region30: #{discriminator_forward_lanes.1} parent=5 // pred_check_branch
        %160 = sbr.rel (%p157) target = $region32
      $region31: #{discriminator_forward_lanes.1} parent=5 // pred_region
        %s161 = ssub.s32 %s15, 1
        %s162 = sand.u32 %s28, 1
        %s163 = scalar_lea.sflag [#allocation3], %s162
        %s164 = sand.u32 %s28, 1
        %s165 = smul.addr %s164, 1024
        %s166 = scalar_lea.vmem [#allocation2], %s165
        // Predicated region
        $region33: #{discriminator_forward_lanes.1} parent=31 // pred_check
          %p167 = pneg %p41
        $region34: #{discriminator_forward_lanes.1} parent=31 // pred_check_branch
          %169 = sbr.rel (%p167) target = $region36
        $region35: #{discriminator_forward_lanes.1} parent=31 // pred_region
          %170 = dma.done %s163, 16384
        $region36: #{discriminator_forward_lanes.1} parent=31 // pred_fallthru
          _
        %s171 = sand.u32 %s28, 1
        %s172 = scalar_lea.sflag [#allocation3], %s171
        %s173 = sand.u32 %s28, 1
        %s174 = smul.addr %s173, 1024
        %s175 = scalar_lea.vmem [#allocation2], %s174
        %p176 = pneg %p41
        %p177 = pneg %p38
        %p178 = pneg %p62
        %p179 = pneg %p59
        %p180 = pneg %p83
        %p181 = pneg %p80
        %p182 = pneg %p109
        %p183 = pneg %p106
        %s184 = sand.u32 %s96, 1
        %s185 = scalar_lea.sflag [#allocation4], %s184
        %s186 = sand.u32 %s96, 1
        %s187 = smul.addr %s186, 64
        %s188 = scalar_lea.vmem [#allocation5], %s187
        %s189 = smul.u32 128, %s20
        %s190 = smul.u32 8, %s20
        %v192 = vld [vmem:[%s166] sm:$0xff]
        %v193 = vld [vmem:[%s166 + $0x8] sm:$0xff]
        %v194 = vld [vmem:[%s166 + $0x10] sm:$0xff]
        %v195 = vld [vmem:[%s166 + $0x18] sm:$0xff]
        %v196 = vld [vmem:[%s166 + $0x20] sm:$0xff]
        %v197 = vld [vmem:[%s166 + $0x28] sm:$0xff]
        %v198 = vld [vmem:[%s166 + $0x30] sm:$0xff]
        %v199 = vld [vmem:[%s166 + $0x38] sm:$0xff]
        %v200 = vld [vmem:[%s166 + $0x40] sm:$0xff]
        %v201 = vld [vmem:[%s166 + $0x48] sm:$0xff]
        %v202 = vld [vmem:[%s166 + $0x50] sm:$0xff]
        %v203 = vld [vmem:[%s166 + $0x58] sm:$0xff]
        %v204 = vld [vmem:[%s166 + $0x60] sm:$0xff]
        %v205 = vld [vmem:[%s166 + $0x68] sm:$0xff]
        %v206 = vld [vmem:[%s166 + $0x70] sm:$0xff]
        %v207 = vld [vmem:[%s166 + $0x78] sm:$0xff]
        %v208 = vld [vmem:[%s166 + $0x80] sm:$0xff]
        %v209 = vld [vmem:[%s166 + $0x88] sm:$0xff]
        %v210 = vld [vmem:[%s166 + $0x90] sm:$0xff]
        %v211 = vld [vmem:[%s166 + $0x98] sm:$0xff]
        %v212 = vld [vmem:[%s166 + $0xa0] sm:$0xff]
        %v213 = vld [vmem:[%s166 + $0xa8] sm:$0xff]
        %v214 = vld [vmem:[%s166 + $0xb0] sm:$0xff]
        %v215 = vld [vmem:[%s166 + $0xb8] sm:$0xff]
        %v216 = vld [vmem:[%s166 + $0xc0] sm:$0xff]
        %v217 = vld [vmem:[%s166 + $0xc8] sm:$0xff]
        %v218 = vld [vmem:[%s166 + $0xd0] sm:$0xff]
        %v219 = vld [vmem:[%s166 + $0xd8] sm:$0xff]
        %v220 = vld [vmem:[%s166 + $0xe0] sm:$0xff]
        %v221 = vld [vmem:[%s166 + $0xe8] sm:$0xff]
        %v222 = vld [vmem:[%s166 + $0xf0] sm:$0xff]
        %v223 = vld [vmem:[%s166 + $0xf8] sm:$0xff]
        %v224 = vld [vmem:[%s166 + $0x100] sm:$0xff]
        %v225 = vld [vmem:[%s166 + $0x108] sm:$0xff]
        %v226 = vld [vmem:[%s166 + $0x110] sm:$0xff]
        %v227 = vld [vmem:[%s166 + $0x118] sm:$0xff]
        %v228 = vld [vmem:[%s166 + $0x120] sm:$0xff]
        %v229 = vld [vmem:[%s166 + $0x128] sm:$0xff]
        %v230 = vld [vmem:[%s166 + $0x130] sm:$0xff]
        %v231 = vld [vmem:[%s166 + $0x138] sm:$0xff]
        %v232 = vld [vmem:[%s166 + $0x140] sm:$0xff]
        %v233 = vld [vmem:[%s166 + $0x148] sm:$0xff]
        %v234 = vld [vmem:[%s166 + $0x150] sm:$0xff]
        %v235 = vld [vmem:[%s166 + $0x158] sm:$0xff]
        %v236 = vld [vmem:[%s166 + $0x160] sm:$0xff]
        %v237 = vld [vmem:[%s166 + $0x168] sm:$0xff]
        %v238 = vld [vmem:[%s166 + $0x170] sm:$0xff]
        %v239 = vld [vmem:[%s166 + $0x178] sm:$0xff]
        %v240 = vld [vmem:[%s166 + $0x180] sm:$0xff]
        %v241 = vld [vmem:[%s166 + $0x188] sm:$0xff]
        %v242 = vld [vmem:[%s166 + $0x190] sm:$0xff]
        %v243 = vld [vmem:[%s166 + $0x198] sm:$0xff]
        %v244 = vld [vmem:[%s166 + $0x1a0] sm:$0xff]
        %v245 = vld [vmem:[%s166 + $0x1a8] sm:$0xff]
        %v246 = vld [vmem:[%s166 + $0x1b0] sm:$0xff]
        %v247 = vld [vmem:[%s166 + $0x1b8] sm:$0xff]
        %v248 = vld [vmem:[%s166 + $0x1c0] sm:$0xff]
        %v249 = vld [vmem:[%s166 + $0x1c8] sm:$0xff]
        %v250 = vld [vmem:[%s166 + $0x1d0] sm:$0xff]
        %v251 = vld [vmem:[%s166 + $0x1d8] sm:$0xff]
        %v252 = vld [vmem:[%s166 + $0x1e0] sm:$0xff]
        %v253 = vld [vmem:[%s166 + $0x1e8] sm:$0xff]
        %v254 = vld [vmem:[%s166 + $0x1f0] sm:$0xff]
        %v255 = vld [vmem:[%s166 + $0x1f8] sm:$0xff]
        %v256 = vld [vmem:[%s166 + $0x200] sm:$0xff]
        %v257 = vld [vmem:[%s166 + $0x208] sm:$0xff]
        %v258 = vld [vmem:[%s166 + $0x210] sm:$0xff]
        %v259 = vld [vmem:[%s166 + $0x218] sm:$0xff]
        %v260 = vld [vmem:[%s166 + $0x220] sm:$0xff]
        %v261 = vld [vmem:[%s166 + $0x228] sm:$0xff]
        %v262 = vld [vmem:[%s166 + $0x230] sm:$0xff]
        %v263 = vld [vmem:[%s166 + $0x238] sm:$0xff]
        %v264 = vld [vmem:[%s166 + $0x240] sm:$0xff]
        %v265 = vld [vmem:[%s166 + $0x248] sm:$0xff]
        %v266 = vld [vmem:[%s166 + $0x250] sm:$0xff]
        %v267 = vld [vmem:[%s166 + $0x258] sm:$0xff]
        %v268 = vld [vmem:[%s166 + $0x260] sm:$0xff]
        %v269 = vld [vmem:[%s166 + $0x268] sm:$0xff]
        %v270 = vld [vmem:[%s166 + $0x270] sm:$0xff]
        %v271 = vld [vmem:[%s166 + $0x278] sm:$0xff]
        %v272 = vld [vmem:[%s166 + $0x280] sm:$0xff]
        %v273 = vld [vmem:[%s166 + $0x288] sm:$0xff]
        %v274 = vld [vmem:[%s166 + $0x290] sm:$0xff]
        %v275 = vld [vmem:[%s166 + $0x298] sm:$0xff]
        %v276 = vld [vmem:[%s166 + $0x2a0] sm:$0xff]
        %v277 = vld [vmem:[%s166 + $0x2a8] sm:$0xff]
        %v278 = vld [vmem:[%s166 + $0x2b0] sm:$0xff]
        %v279 = vld [vmem:[%s166 + $0x2b8] sm:$0xff]
        %v280 = vld [vmem:[%s166 + $0x2c0] sm:$0xff]
        %v281 = vld [vmem:[%s166 + $0x2c8] sm:$0xff]
        %v282 = vld [vmem:[%s166 + $0x2d0] sm:$0xff]
        %v283 = vld [vmem:[%s166 + $0x2d8] sm:$0xff]
        %v284 = vld [vmem:[%s166 + $0x2e0] sm:$0xff]
        %v285 = vld [vmem:[%s166 + $0x2e8] sm:$0xff]
        %v286 = vld [vmem:[%s166 + $0x2f0] sm:$0xff]
        %v287 = vld [vmem:[%s166 + $0x2f8] sm:$0xff]
        %v288 = vld [vmem:[%s166 + $0x300] sm:$0xff]
        %v289 = vld [vmem:[%s166 + $0x308] sm:$0xff]
        %v290 = vld [vmem:[%s166 + $0x310] sm:$0xff]
        %v291 = vld [vmem:[%s166 + $0x318] sm:$0xff]
        %v292 = vld [vmem:[%s166 + $0x320] sm:$0xff]
        %v293 = vld [vmem:[%s166 + $0x328] sm:$0xff]
        %v294 = vld [vmem:[%s166 + $0x330] sm:$0xff]
        %v295 = vld [vmem:[%s166 + $0x338] sm:$0xff]
        %v296 = vld [vmem:[%s166 + $0x340] sm:$0xff]
        %v297 = vld [vmem:[%s166 + $0x348] sm:$0xff]
        %v298 = vld [vmem:[%s166 + $0x350] sm:$0xff]
        %v299 = vld [vmem:[%s166 + $0x358] sm:$0xff]
        %v300 = vld [vmem:[%s166 + $0x360] sm:$0xff]
        %v301 = vld [vmem:[%s166 + $0x368] sm:$0xff]
        %v302 = vld [vmem:[%s166 + $0x370] sm:$0xff]
        %v303 = vld [vmem:[%s166 + $0x378] sm:$0xff]
        %v304 = vld [vmem:[%s166 + $0x380] sm:$0xff]
        %v305 = vld [vmem:[%s166 + $0x388] sm:$0xff]
        %v306 = vld [vmem:[%s166 + $0x390] sm:$0xff]
        %v307 = vld [vmem:[%s166 + $0x398] sm:$0xff]
        %v308 = vld [vmem:[%s166 + $0x3a0] sm:$0xff]
        %v309 = vld [vmem:[%s166 + $0x3a8] sm:$0xff]
        %v310 = vld [vmem:[%s166 + $0x3b0] sm:$0xff]
        %v311 = vld [vmem:[%s166 + $0x3b8] sm:$0xff]
        %v312 = vld [vmem:[%s166 + $0x3c0] sm:$0xff]
        %v313 = vld [vmem:[%s166 + $0x3c8] sm:$0xff]
        %v314 = vld [vmem:[%s166 + $0x3d0] sm:$0xff]
        %v315 = vld [vmem:[%s166 + $0x3d8] sm:$0xff]
        %v316 = vld [vmem:[%s166 + $0x3e0] sm:$0xff]
        %v317 = vld [vmem:[%s166 + $0x3e8] sm:$0xff]
        %v318 = vld [vmem:[%s166 + $0x3f0] sm:$0xff]
        %v319 = vld [vmem:[%s166 + $0x3f8] sm:$0xff]
        %v320 = vpack.c.bf16 %v193, %v192
        %v321 = vpack.c.bf16 %v195, %v194
        %v322 = vpack.c.bf16 %v197, %v196
        %v323 = vpack.c.bf16 %v199, %v198
        %v324 = vpack.c.bf16 %v201, %v200
        %v325 = vpack.c.bf16 %v203, %v202
        %v326 = vpack.c.bf16 %v205, %v204
        %v327 = vpack.c.bf16 %v207, %v206
        %v328 = vpack.c.bf16 %v209, %v208
        %v329 = vpack.c.bf16 %v211, %v210
        %v330 = vpack.c.bf16 %v213, %v212
        %v331 = vpack.c.bf16 %v215, %v214
        %v332 = vpack.c.bf16 %v217, %v216
        %v333 = vpack.c.bf16 %v219, %v218
        %v334 = vpack.c.bf16 %v221, %v220
        %v335 = vpack.c.bf16 %v223, %v222
        %v336 = vpack.c.bf16 %v225, %v224
        %v337 = vpack.c.bf16 %v227, %v226
        %v338 = vpack.c.bf16 %v229, %v228
        %v339 = vpack.c.bf16 %v231, %v230
        %v340 = vpack.c.bf16 %v233, %v232
        %v341 = vpack.c.bf16 %v235, %v234
        %v342 = vpack.c.bf16 %v237, %v236
        %v343 = vpack.c.bf16 %v239, %v238
        %v344 = vpack.c.bf16 %v241, %v240
        %v345 = vpack.c.bf16 %v243, %v242
        %v346 = vpack.c.bf16 %v245, %v244
        %v347 = vpack.c.bf16 %v247, %v246
        %v348 = vpack.c.bf16 %v249, %v248
        %v349 = vpack.c.bf16 %v251, %v250
        %v350 = vpack.c.bf16 %v253, %v252
        %v351 = vpack.c.bf16 %v255, %v254
        %v352 = vpack.c.bf16 %v257, %v256
        %v353 = vpack.c.bf16 %v259, %v258
        %v354 = vpack.c.bf16 %v261, %v260
        %v355 = vpack.c.bf16 %v263, %v262
        %v356 = vpack.c.bf16 %v265, %v264
        %v357 = vpack.c.bf16 %v267, %v266
        %v358 = vpack.c.bf16 %v269, %v268
        %v359 = vpack.c.bf16 %v271, %v270
        %v360 = vpack.c.bf16 %v273, %v272
        %v361 = vpack.c.bf16 %v275, %v274
        %v362 = vpack.c.bf16 %v277, %v276
        %v363 = vpack.c.bf16 %v279, %v278
        %v364 = vpack.c.bf16 %v281, %v280
        %v365 = vpack.c.bf16 %v283, %v282
        %v366 = vpack.c.bf16 %v285, %v284
        %v367 = vpack.c.bf16 %v287, %v286
        %v368 = vpack.c.bf16 %v289, %v288
        %v369 = vpack.c.bf16 %v291, %v290
        %v370 = vpack.c.bf16 %v293, %v292
        %v371 = vpack.c.bf16 %v295, %v294
        %v372 = vpack.c.bf16 %v297, %v296
        %v373 = vpack.c.bf16 %v299, %v298
        %v374 = vpack.c.bf16 %v301, %v300
        %v375 = vpack.c.bf16 %v303, %v302
        %v376 = vpack.c.bf16 %v305, %v304
        %v377 = vpack.c.bf16 %v307, %v306
        %v378 = vpack.c.bf16 %v309, %v308
        %v379 = vpack.c.bf16 %v311, %v310
        %v380 = vpack.c.bf16 %v313, %v312
        %v381 = vpack.c.bf16 %v315, %v314
        %v382 = vpack.c.bf16 %v317, %v316
        %v383 = vpack.c.bf16 %v319, %v318
        %v384 = vld [vmem:[%s1] sm:$0xf]
        %v385 = vld [vmem:[%s1 + $0x4] sm:$0xf]
        %v386 = vld [vmem:[%s1 + $0x8] sm:$0xf]
        %v387 = vld [vmem:[%s1 + $0xc] sm:$0xf]
        %v388 = vld [vmem:[%s1 + $0x10] sm:$0xf]
        %v389 = vld [vmem:[%s1 + $0x14] sm:$0xf]
        %v390 = vld [vmem:[%s1 + $0x18] sm:$0xf]
        %v391 = vld [vmem:[%s1 + $0x1c] sm:$0xf]
        %v392 = vld [vmem:[%s2] sm:$0xff]
        %v393 = vld [vmem:[%s2 + $0x8] sm:$0xff]
        %v394 = vld [vmem:[%s2 + $0x10] sm:$0xff]
        %v395 = vld [vmem:[%s2 + $0x18] sm:$0xff]
        %v396 = vld [vmem:[%s2 + $0x20] sm:$0xff]
        %v397 = vld [vmem:[%s2 + $0x28] sm:$0xff]
        %v398 = vld [vmem:[%s2 + $0x30] sm:$0xff]
        %v399 = vld [vmem:[%s2 + $0x38] sm:$0xff]
        %401 = vset.pattern.permute.xlu0 0
        %402 = vperm.xlu0 %401, %v392
        %v403 = vpop.permute.xlu0 %402
        %406 = vset.pattern.permute.xlu0 0
        %407 = vperm.xlu0 %406, %v393
        %v408 = vpop.permute.xlu0 %407
        %411 = vset.pattern.permute.xlu0 0
        %412 = vperm.xlu0 %411, %v394
        %v413 = vpop.permute.xlu0 %412
        %416 = vset.pattern.permute.xlu0 0
        %417 = vperm.xlu0 %416, %v395
        %v418 = vpop.permute.xlu0 %417
        %421 = vset.pattern.permute.xlu0 0
        %422 = vperm.xlu0 %421, %v396
        %v423 = vpop.permute.xlu0 %422
        %426 = vset.pattern.permute.xlu0 0
        %427 = vperm.xlu0 %426, %v397
        %v428 = vpop.permute.xlu0 %427
        %431 = vset.pattern.permute.xlu0 0
        %432 = vperm.xlu0 %431, %v398
        %v433 = vpop.permute.xlu0 %432
        %436 = vset.pattern.permute.xlu0 0
        %437 = vperm.xlu0 %436, %v399
        %v438 = vpop.permute.xlu0 %437
        %v448 = vunpack.c.l.b16 %v384
        %v449 = vunpack.c.l.b16 %v385
        %v450 = vunpack.c.l.b16 %v386
        %v451 = vunpack.c.l.b16 %v387
        %v452 = vunpack.c.l.b16 %v388
        %v453 = vunpack.c.l.b16 %v389
        %v454 = vunpack.c.l.b16 %v390
        %v455 = vunpack.c.l.b16 %v391
        %v456 = vpack.c.b16 %v449, %v448
        %v457 = vpack.c.b16 %v451, %v450
        %v458 = vpack.c.b16 %v453, %v452
        %v459 = vpack.c.b16 %v455, %v454
        %464 = vmatprep.subr.bf16.mxu0 0
        %465 = vmatpush1.bf16.xpose.msra.mxu0 %v320
        %466 = vmatprep.subr.bf16.mxu0 0
        %467 = vmatpush1.bf16.xpose.msra.mxu0 %v321
        %468 = vmatprep.subr.bf16.mxu0 0
        %469 = vmatpush1.bf16.xpose.msra.mxu0 %v322
        %470 = vmatprep.subr.bf16.mxu0 0
        %471 = vmatpush1.bf16.xpose.msra.mxu0 %v323
        %472 = vmatprep.subr.bf16.mxu0 0
        %473 = vmatpush1.bf16.xpose.msra.mxu0 %v324
        %474 = vmatprep.subr.bf16.mxu0 0
        %475 = vmatpush1.bf16.xpose.msra.mxu0 %v325
        %476 = vmatprep.subr.bf16.mxu0 0
        %477 = vmatpush1.bf16.xpose.msra.mxu0 %v326
        %478 = vmatprep.subr.bf16.mxu0 0
        %479 = vmatpush1.bf16.xpose.msra.mxu0 %v327
        %480 = vmatprep.subr.bf16.mxu0 0
        %481 = vmatpush1.bf16.xpose.msra.mxu0 %v328
        %482 = vmatprep.subr.bf16.mxu0 0
        %483 = vmatpush1.bf16.xpose.msra.mxu0 %v329
        %484 = vmatprep.subr.bf16.mxu0 0
        %485 = vmatpush1.bf16.xpose.msra.mxu0 %v330
        %486 = vmatprep.subr.bf16.mxu0 0
        %487 = vmatpush1.bf16.xpose.msra.mxu0 %v331
        %488 = vmatprep.subr.bf16.mxu0 0
        %489 = vmatpush1.bf16.xpose.msra.mxu0 %v332
        %490 = vmatprep.subr.bf16.mxu0 0
        %491 = vmatpush1.bf16.xpose.msra.mxu0 %v333
        %492 = vmatprep.subr.bf16.mxu0 0
        %493 = vmatpush1.bf16.xpose.msra.mxu0 %v334
        %494 = vmatprep.subr.bf16.mxu0 0
        %495 = vmatpush1.bf16.xpose.msra.mxu0 %v335
        %496 = vmatprep.mubr.bf16.mxu0 0
        %497 = vmatmul.mubr.bf16.gmra.mrb[0].mxu0 %v456
        %v498 = vpop.f32.mrb[0].mxu0
        %v499 = vadd.f32 %v403, %v498
        %v500 = vpop.f32.mrb[0].mxu0
        %v501 = vadd.f32 %v403, %v500
        %v502 = vpop.f32.mrb[0].mxu0
        %v503 = vadd.f32 %v408, %v502
        %v504 = vpop.f32.mrb[0].mxu0
        %v505 = vadd.f32 %v408, %v504
        %506 = vmatprep.mubr.bf16.mxu0 0
        %507 = vmatmul.mubr.bf16.gmra.mrb[0].mxu0 %v457
        %v508 = vpop.f32.mrb[0].mxu0
        %v509 = vadd.f32 %v413, %v508
        %v510 = vpop.f32.mrb[0].mxu0
        %v511 = vadd.f32 %v413, %v510
        %v512 = vpop.f32.mrb[0].mxu0
        %v513 = vadd.f32 %v418, %v512
        %v514 = vpop.f32.mrb[0].mxu0
        %v515 = vadd.f32 %v418, %v514
        %516 = vmatprep.mubr.bf16.mxu0 0
        %517 = vmatmul.mubr.bf16.gmra.mrb[0].mxu0 %v458
        %v518 = vpop.f32.mrb[0].mxu0
        %v519 = vadd.f32 %v423, %v518
        %v520 = vpop.f32.mrb[0].mxu0
        %v521 = vadd.f32 %v423, %v520
        %v522 = vpop.f32.mrb[0].mxu0
        %v523 = vadd.f32 %v428, %v522
        %v524 = vpop.f32.mrb[0].mxu0
        %v525 = vadd.f32 %v428, %v524
        %526 = vmatprep.mubr.bf16.mxu0 0
        %527 = vmatmul.mubr.bf16.gmra.mrb[0].mxu0 %v459
        %v528 = vpop.f32.mrb[0].mxu0
        %v529 = vadd.f32 %v433, %v528
        %v530 = vpop.f32.mrb[0].mxu0
        %v531 = vadd.f32 %v433, %v530
        %v532 = vpop.f32.mrb[0].mxu0
        %v533 = vadd.f32 %v438, %v532
        %v534 = vpop.f32.mrb[0].mxu0
        %v535 = vadd.f32 %v438, %v534
        %536 = vdwg.mxu0
        %537 = vmatprep.subr.bf16.mxu0 0
        %538 = vmatpush1.bf16.xpose.msra.mxu0 %v336
        %539 = vmatprep.subr.bf16.mxu0 0
        %540 = vmatpush1.bf16.xpose.msra.mxu0 %v337
        %541 = vmatprep.subr.bf16.mxu0 0
        %542 = vmatpush1.bf16.xpose.msra.mxu0 %v338
        %543 = vmatprep.subr.bf16.mxu0 0
        %544 = vmatpush1.bf16.xpose.msra.mxu0 %v339
        %545 = vmatprep.subr.bf16.mxu0 0
        %546 = vmatpush1.bf16.xpose.msra.mxu0 %v340
        %547 = vmatprep.subr.bf16.mxu0 0
        %548 = vmatpush1.bf16.xpose.msra.mxu0 %v341
        %549 = vmatprep.subr.bf16.mxu0 0
        %550 = vmatpush1.bf16.xpose.msra.mxu0 %v342
        %551 = vmatprep.subr.bf16.mxu0 0
        %552 = vmatpush1.bf16.xpose.msra.mxu0 %v343
        %553 = vmatprep.subr.bf16.mxu0 0
        %554 = vmatpush1.bf16.xpose.msra.mxu0 %v344
        %555 = vmatprep.subr.bf16.mxu0 0
        %556 = vmatpush1.bf16.xpose.msra.mxu0 %v345
        %557 = vmatprep.subr.bf16.mxu0 0
        %558 = vmatpush1.bf16.xpose.msra.mxu0 %v346
        %559 = vmatprep.subr.bf16.mxu0 0
        %560 = vmatpush1.bf16.xpose.msra.mxu0 %v347
        %561 = vmatprep.subr.bf16.mxu0 0
        %562 = vmatpush1.bf16.xpose.msra.mxu0 %v348
        %563 = vmatprep.subr.bf16.mxu0 0
        %564 = vmatpush1.bf16.xpose.msra.mxu0 %v349
        %565 = vmatprep.subr.bf16.mxu0 0
        %566 = vmatpush1.bf16.xpose.msra.mxu0 %v350
        %567 = vmatprep.subr.bf16.mxu0 0
        %568 = vmatpush1.bf16.xpose.msra.mxu0 %v351
        %569 = vmatprep.mubr.bf16.mxu0 0
        %570 = vmatmul.mubr.bf16.gmra.mrb[0].mxu0 %v456
        %v571 = vpop.f32.mrb[0].mxu0
        %v572 = vadd.f32 %v403, %v571
        %v573 = vpop.f32.mrb[0].mxu0
        %v574 = vadd.f32 %v403, %v573
        %v575 = vpop.f32.mrb[0].mxu0
        %v576 = vadd.f32 %v408, %v575
        %v577 = vpop.f32.mrb[0].mxu0
        %v578 = vadd.f32 %v408, %v577
        %579 = vmatprep.mubr.bf16.mxu0 0
        %580 = vmatmul.mubr.bf16.gmra.mrb[0].mxu0 %v457
        %v581 = vpop.f32.mrb[0].mxu0
        %v582 = vadd.f32 %v413, %v581
        %v583 = vpop.f32.mrb[0].mxu0
        %v584 = vadd.f32 %v413, %v583
        %v585 = vpop.f32.mrb[0].mxu0
        %v586 = vadd.f32 %v418, %v585
        %v587 = vpop.f32.mrb[0].mxu0
        %v588 = vadd.f32 %v418, %v587
        %589 = vmatprep.mubr.bf16.mxu0 0
        %590 = vmatmul.mubr.bf16.gmra.mrb[0].mxu0 %v458
        %v591 = vpop.f32.mrb[0].mxu0
        %v592 = vadd.f32 %v423, %v591
        %v593 = vpop.f32.mrb[0].mxu0
        %v594 = vadd.f32 %v423, %v593
        %v595 = vpop.f32.mrb[0].mxu0
        %v596 = vadd.f32 %v428, %v595
        %v597 = vpop.f32.mrb[0].mxu0
        %v598 = vadd.f32 %v428, %v597
        %599 = vmatprep.mubr.bf16.mxu0 0
        %600 = vmatmul.mubr.bf16.gmra.mrb[0].mxu0 %v459
        %v601 = vpop.f32.mrb[0].mxu0
        %v602 = vadd.f32 %v433, %v601
        %v603 = vpop.f32.mrb[0].mxu0
        %v604 = vadd.f32 %v433, %v603
        %v605 = vpop.f32.mrb[0].mxu0
        %v606 = vadd.f32 %v438, %v605
        %v607 = vpop.f32.mrb[0].mxu0
        %v608 = vadd.f32 %v438, %v607
        %609 = vdwg.mxu0
        %610 = vmatprep.subr.bf16.mxu0 0
        %611 = vmatpush1.bf16.xpose.msra.mxu0 %v352
        %612 = vmatprep.subr.bf16.mxu0 0
        %613 = vmatpush1.bf16.xpose.msra.mxu0 %v353
        %614 = vmatprep.subr.bf16.mxu0 0
        %615 = vmatpush1.bf16.xpose.msra.mxu0 %v354
        %616 = vmatprep.subr.bf16.mxu0 0
        %617 = vmatpush1.bf16.xpose.msra.mxu0 %v355
        %618 = vmatprep.subr.bf16.mxu0 0
        %619 = vmatpush1.bf16.xpose.msra.mxu0 %v356
        %620 = vmatprep.subr.bf16.mxu0 0
        %621 = vmatpush1.bf16.xpose.msra.mxu0 %v357
        %622 = vmatprep.subr.bf16.mxu0 0
        %623 = vmatpush1.bf16.xpose.msra.mxu0 %v358
        %624 = vmatprep.subr.bf16.mxu0 0
        %625 = vmatpush1.bf16.xpose.msra.mxu0 %v359
        %626 = vmatprep.subr.bf16.mxu0 0
        %627 = vmatpush1.bf16.xpose.msra.mxu0 %v360
        %628 = vmatprep.subr.bf16.mxu0 0
        %629 = vmatpush1.bf16.xpose.msra.mxu0 %v361
        %630 = vmatprep.subr.bf16.mxu0 0
        %631 = vmatpush1.bf16.xpose.msra.mxu0 %v362
        %632 = vmatprep.subr.bf16.mxu0 0
        %633 = vmatpush1.bf16.xpose.msra.mxu0 %v363
        %634 = vmatprep.subr.bf16.mxu0 0
        %635 = vmatpush1.bf16.xpose.msra.mxu0 %v364
        %636 = vmatprep.subr.bf16.mxu0 0
        %637 = vmatpush1.bf16.xpose.msra.mxu0 %v365
        %638 = vmatprep.subr.bf16.mxu0 0
        %639 = vmatpush1.bf16.xpose.msra.mxu0 %v366
        %640 = vmatprep.subr.bf16.mxu0 0
        %641 = vmatpush1.bf16.xpose.msra.mxu0 %v367
        %642 = vmatprep.mubr.bf16.mxu0 0
        %643 = vmatmul.mubr.bf16.gmra.mrb[0].mxu0 %v456
        %v644 = vpop.f32.mrb[0].mxu0
        %v645 = vadd.f32 %v403, %v644
        %v646 = vpop.f32.mrb[0].mxu0
        %v647 = vadd.f32 %v403, %v646
        %v648 = vpop.f32.mrb[0].mxu0
        %v649 = vadd.f32 %v408, %v648
        %v650 = vpop.f32.mrb[0].mxu0
        %v651 = vadd.f32 %v408, %v650
        %652 = vmatprep.mubr.bf16.mxu0 0
        %653 = vmatmul.mubr.bf16.gmra.mrb[0].mxu0 %v457
        %v654 = vpop.f32.mrb[0].mxu0
        %v655 = vadd.f32 %v413, %v654
        %v656 = vpop.f32.mrb[0].mxu0
        %v657 = vadd.f32 %v413, %v656
        %v658 = vpop.f32.mrb[0].mxu0
        %v659 = vadd.f32 %v418, %v658
        %v660 = vpop.f32.mrb[0].mxu0
        %v661 = vadd.f32 %v418, %v660
        %662 = vmatprep.mubr.bf16.mxu0 0
        %663 = vmatmul.mubr.bf16.gmra.mrb[0].mxu0 %v458
        %v664 = vpop.f32.mrb[0].mxu0
        %v665 = vadd.f32 %v423, %v664
        %v666 = vpop.f32.mrb[0].mxu0
        %v667 = vadd.f32 %v423, %v666
        %v668 = vpop.f32.mrb[0].mxu0
        %v669 = vadd.f32 %v428, %v668
        %v670 = vpop.f32.mrb[0].mxu0
        %v671 = vadd.f32 %v428, %v670
        %672 = vmatprep.mubr.bf16.mxu0 0
        %673 = vmatmul.mubr.bf16.gmra.mrb[0].mxu0 %v459
        %v674 = vpop.f32.mrb[0].mxu0
        %v675 = vadd.f32 %v433, %v674
        %v676 = vpop.f32.mrb[0].mxu0
        %v677 = vadd.f32 %v433, %v676
        %v678 = vpop.f32.mrb[0].mxu0
        %v679 = vadd.f32 %v438, %v678
        %v680 = vpop.f32.mrb[0].mxu0
        %v681 = vadd.f32 %v438, %v680
        %682 = vdwg.mxu0
        %683 = vmatprep.subr.bf16.mxu0 0
        %684 = vmatpush1.bf16.xpose.msra.mxu0 %v368
        %685 = vmatprep.subr.bf16.mxu0 0
        %686 = vmatpush1.bf16.xpose.msra.mxu0 %v369
        %687 = vmatprep.subr.bf16.mxu0 0
        %688 = vmatpush1.bf16.xpose.msra.mxu0 %v370
        %689 = vmatprep.subr.bf16.mxu0 0
        %690 = vmatpush1.bf16.xpose.msra.mxu0 %v371
        %691 = vmatprep.subr.bf16.mxu0 0
        %692 = vmatpush1.bf16.xpose.msra.mxu0 %v372
        %693 = vmatprep.subr.bf16.mxu0 0
        %694 = vmatpush1.bf16.xpose.msra.mxu0 %v373
        %695 = vmatprep.subr.bf16.mxu0 0
        %696 = vmatpush1.bf16.xpose.msra.mxu0 %v374
        %697 = vmatprep.subr.bf16.mxu0 0
        %698 = vmatpush1.bf16.xpose.msra.mxu0 %v375
        %699 = vmatprep.subr.bf16.mxu0 0
        %700 = vmatpush1.bf16.xpose.msra.mxu0 %v376
        %701 = vmatprep.subr.bf16.mxu0 0
        %702 = vmatpush1.bf16.xpose.msra.mxu0 %v377
        %703 = vmatprep.subr.bf16.mxu0 0
        %704 = vmatpush1.bf16.xpose.msra.mxu0 %v378
        %705 = vmatprep.subr.bf16.mxu0 0
        %706 = vmatpush1.bf16.xpose.msra.mxu0 %v379
        %707 = vmatprep.subr.bf16.mxu0 0
        %708 = vmatpush1.bf16.xpose.msra.mxu0 %v380
        %709 = vmatprep.subr.bf16.mxu0 0
        %710 = vmatpush1.bf16.xpose.msra.mxu0 %v381
        %711 = vmatprep.subr.bf16.mxu0 0
        %712 = vmatpush1.bf16.xpose.msra.mxu0 %v382
        %713 = vmatprep.subr.bf16.mxu0 0
        %714 = vmatpush1.bf16.xpose.msra.mxu0 %v383
        %715 = vmatprep.mubr.bf16.mxu0 0
        %716 = vmatmul.mubr.bf16.gmra.mrb[0].mxu0 %v456
        %v717 = vpop.f32.mrb[0].mxu0
        %v718 = vadd.f32 %v403, %v717
        %v719 = vpop.f32.mrb[0].mxu0
        %v720 = vadd.f32 %v403, %v719
        %v721 = vpop.f32.mrb[0].mxu0
        %v722 = vadd.f32 %v408, %v721
        %v723 = vpop.f32.mrb[0].mxu0
        %v724 = vadd.f32 %v408, %v723
        %725 = vmatprep.mubr.bf16.mxu0 0
        %726 = vmatmul.mubr.bf16.gmra.mrb[0].mxu0 %v457
        %v727 = vpop.f32.mrb[0].mxu0
        %v728 = vadd.f32 %v413, %v727
        %v729 = vpop.f32.mrb[0].mxu0
        %v730 = vadd.f32 %v413, %v729
        %v731 = vpop.f32.mrb[0].mxu0
        %v732 = vadd.f32 %v418, %v731
        %v733 = vpop.f32.mrb[0].mxu0
        %v734 = vadd.f32 %v418, %v733
        %735 = vmatprep.mubr.bf16.mxu0 0
        %736 = vmatmul.mubr.bf16.gmra.mrb[0].mxu0 %v458
        %v737 = vpop.f32.mrb[0].mxu0
        %v738 = vadd.f32 %v423, %v737
        %v739 = vpop.f32.mrb[0].mxu0
        %v740 = vadd.f32 %v423, %v739
        %v741 = vpop.f32.mrb[0].mxu0
        %v742 = vadd.f32 %v428, %v741
        %v743 = vpop.f32.mrb[0].mxu0
        %v744 = vadd.f32 %v428, %v743
        %745 = vmatprep.mubr.bf16.mxu0 0
        %746 = vmatmul.mubr.bf16.gmra.mrb[0].mxu0 %v459
        %v747 = vpop.f32.mrb[0].mxu0
        %v748 = vadd.f32 %v433, %v747
        %v749 = vpop.f32.mrb[0].mxu0
        %v750 = vadd.f32 %v433, %v749
        %v751 = vpop.f32.mrb[0].mxu0
        %v752 = vadd.f32 %v438, %v751
        %v753 = vpop.f32.mrb[0].mxu0
        %v754 = vadd.f32 %v438, %v753
        %755 = vdwg.mxu0
        %v756 = vmax.f32 %v499, 0.0
        %v757 = vmax.f32 %v501, 0.0
        %v758 = vmax.f32 %v572, 0.0
        %v759 = vmax.f32 %v574, 0.0
        %v760 = vmax.f32 %v645, 0.0
        %v761 = vmax.f32 %v647, 0.0
        %v762 = vmax.f32 %v718, 0.0
        %v763 = vmax.f32 %v720, 0.0
        %v764 = vmax.f32 %v503, 0.0
        %v765 = vmax.f32 %v505, 0.0
        %v766 = vmax.f32 %v576, 0.0
        %v767 = vmax.f32 %v578, 0.0
        %v768 = vmax.f32 %v649, 0.0
        %v769 = vmax.f32 %v651, 0.0
        %v770 = vmax.f32 %v722, 0.0
        %v771 = vmax.f32 %v724, 0.0
        %v772 = vmax.f32 %v509, 0.0
        %v773 = vmax.f32 %v511, 0.0
        %v774 = vmax.f32 %v582, 0.0
        %v775 = vmax.f32 %v584, 0.0
        %v776 = vmax.f32 %v655, 0.0
        %v777 = vmax.f32 %v657, 0.0
        %v778 = vmax.f32 %v728, 0.0
        %v779 = vmax.f32 %v730, 0.0
        %v780 = vmax.f32 %v513, 0.0
        %v781 = vmax.f32 %v515, 0.0
        %v782 = vmax.f32 %v586, 0.0
        %v783 = vmax.f32 %v588, 0.0
        %v784 = vmax.f32 %v659, 0.0
        %v785 = vmax.f32 %v661, 0.0
        %v786 = vmax.f32 %v732, 0.0
        %v787 = vmax.f32 %v734, 0.0
        %v788 = vmax.f32 %v519, 0.0
        %v789 = vmax.f32 %v521, 0.0
        %v790 = vmax.f32 %v592, 0.0
        %v791 = vmax.f32 %v594, 0.0
        %v792 = vmax.f32 %v665, 0.0
        %v793 = vmax.f32 %v667, 0.0
        %v794 = vmax.f32 %v738, 0.0
        %v795 = vmax.f32 %v740, 0.0
        %v796 = vmax.f32 %v523, 0.0
        %v797 = vmax.f32 %v525, 0.0
        %v798 = vmax.f32 %v596, 0.0
        %v799 = vmax.f32 %v598, 0.0
        %v800 = vmax.f32 %v669, 0.0
        %v801 = vmax.f32 %v671, 0.0
        %v802 = vmax.f32 %v742, 0.0
        %v803 = vmax.f32 %v744, 0.0
        %v804 = vmax.f32 %v529, 0.0
        %v805 = vmax.f32 %v531, 0.0
        %v806 = vmax.f32 %v602, 0.0
        %v807 = vmax.f32 %v604, 0.0
        %v808 = vmax.f32 %v675, 0.0
        %v809 = vmax.f32 %v677, 0.0
        %v810 = vmax.f32 %v748, 0.0
        %v811 = vmax.f32 %v750, 0.0
        %v812 = vmax.f32 %v533, 0.0
        %v813 = vmax.f32 %v535, 0.0
        %v814 = vmax.f32 %v606, 0.0
        %v815 = vmax.f32 %v608, 0.0
        %v816 = vmax.f32 %v679, 0.0
        %v817 = vmax.f32 %v681, 0.0
        %v818 = vmax.f32 %v752, 0.0
        %v819 = vmax.f32 %v754, 0.0
        %v820 = vld [vmem:[%s1 + $0x20] sm:$0xf]
        %v821 = vld [vmem:[%s1 + $0x24] sm:$0xf]
        %v822 = vld [vmem:[%s1 + $0x28] sm:$0xf]
        %v823 = vld [vmem:[%s1 + $0x2c] sm:$0xf]
        %v824 = vpack.c.bf16 %v764, %v756
        %v825 = vpack.c.bf16 %v765, %v757
        %v826 = vpack.c.bf16 %v766, %v758
        %v827 = vpack.c.bf16 %v767, %v759
        %v828 = vpack.c.bf16 %v768, %v760
        %v829 = vpack.c.bf16 %v769, %v761
        %v830 = vpack.c.bf16 %v770, %v762
        %v831 = vpack.c.bf16 %v771, %v763
        %v832 = vpack.c.bf16 %v780, %v772
        %v833 = vpack.c.bf16 %v781, %v773
        %v834 = vpack.c.bf16 %v782, %v774
        %v835 = vpack.c.bf16 %v783, %v775
        %v836 = vpack.c.bf16 %v784, %v776
        %v837 = vpack.c.bf16 %v785, %v777
        %v838 = vpack.c.bf16 %v786, %v778
        %v839 = vpack.c.bf16 %v787, %v779
        %v840 = vpack.c.bf16 %v796, %v788
        %v841 = vpack.c.bf16 %v797, %v789
        %v842 = vpack.c.bf16 %v798, %v790
        %v843 = vpack.c.bf16 %v799, %v791
        %v844 = vpack.c.bf16 %v800, %v792
        %v845 = vpack.c.bf16 %v801, %v793
        %v846 = vpack.c.bf16 %v802, %v794
        %v847 = vpack.c.bf16 %v803, %v795
        %v848 = vpack.c.bf16 %v812, %v804
        %v849 = vpack.c.bf16 %v813, %v805
        %v850 = vpack.c.bf16 %v814, %v806
        %v851 = vpack.c.bf16 %v815, %v807
        %v852 = vpack.c.bf16 %v816, %v808
        %v853 = vpack.c.bf16 %v817, %v809
        %v854 = vpack.c.bf16 %v818, %v810
        %v855 = vpack.c.bf16 %v819, %v811
        %v856 = vld [vmem:[%s2 + $0x40] sm:$0xff]
        %v857 = vld [vmem:[%s2 + $0x48] sm:$0xff]
        %v858 = vld [vmem:[%s2 + $0x50] sm:$0xff]
        %v859 = vld [vmem:[%s2 + $0x58] sm:$0xff]
        %861 = vset.pattern.permute.xlu0 0
        %862 = vperm.xlu0 %861, %v856
        %v863 = vpop.permute.xlu0 %862
        %866 = vset.pattern.permute.xlu0 0
        %867 = vperm.xlu0 %866, %v857
        %v868 = vpop.permute.xlu0 %867
        %871 = vset.pattern.permute.xlu0 0
        %872 = vperm.xlu0 %871, %v858
        %v873 = vpop.permute.xlu0 %872
        %876 = vset.pattern.permute.xlu0 0
        %877 = vperm.xlu0 %876, %v859
        %v878 = vpop.permute.xlu0 %877
        %v884 = vunpack.c.l.b16 %v820
        %v885 = vunpack.c.l.b16 %v821
        %v886 = vunpack.c.l.b16 %v822
        %v887 = vunpack.c.l.b16 %v823
        %v888 = vpack.c.b16 %v885, %v884
        %v889 = vpack.c.b16 %v887, %v886
        %vm890 = vcmask 523264
        %v892 = vsel %vm890, %v888, 0
        %v895 = vsel %vm890, %v889, 0
        %897 = vmatprep.subr.bf16.mxu0 %v825
        %898 = vmatpush1.bf16.msra.mxu0 %v824
        %899 = vmatprep.subr.bf16.mxu0 %v833
        %900 = vmatpush1.bf16.msra.mxu0 %v832
        %901 = vmatprep.subr.bf16.mxu0 %v841
        %902 = vmatpush1.bf16.msra.mxu0 %v840
        %903 = vmatprep.subr.bf16.mxu0 %v849
        %904 = vmatpush1.bf16.msra.mxu0 %v848
        %905 = vmatprep.subr.bf16.mxu0 0
        %906 = vmatpush1.bf16.msra.mxu0 0
        %907 = vmatprep.subr.bf16.mxu0 0
        %908 = vmatpush1.bf16.msra.mxu0 0
        %909 = vmatprep.subr.bf16.mxu0 0
        %910 = vmatpush1.bf16.msra.mxu0 0
        %911 = vmatprep.subr.bf16.mxu0 0
        %912 = vmatpush1.bf16.msra.mxu0 0
        %913 = vmatprep.subr.bf16.mxu0 0
        %914 = vmatpush1.bf16.msra.mxu0 0
        %915 = vmatprep.subr.bf16.mxu0 0
        %916 = vmatpush1.bf16.msra.mxu0 0
        %917 = vmatprep.subr.bf16.mxu0 0
        %918 = vmatpush1.bf16.msra.mxu0 0
        %919 = vmatprep.subr.bf16.mxu0 0
        %920 = vmatpush1.bf16.msra.mxu0 0
        %921 = vmatprep.subr.bf16.mxu0 0
        %922 = vmatpush1.bf16.msra.mxu0 0
        %923 = vmatprep.subr.bf16.mxu0 0
        %924 = vmatpush1.bf16.msra.mxu0 0
        %925 = vmatprep.subr.bf16.mxu0 0
        %926 = vmatpush1.bf16.msra.mxu0 0
        %927 = vmatprep.subr.bf16.mxu0 0
        %928 = vmatpush1.bf16.msra.mxu0 0
        %929 = vmatprep.mubr.bf16.mxu0 0
        %930 = vmatmul.mubr.bf16.gmra.mrb[0].mxu0 %v892
        %v931 = vpop.f32.mrb[0].mxu0
        %v932 = vadd.f32 %v863, %v931
        %v933 = vpop.f32.mrb[0].mxu0
        %v934 = vadd.f32 %v863, %v933
        %v935 = vpop.f32.mrb[0].mxu0
        %v936 = vadd.f32 %v868, %v935
        %v937 = vpop.f32.mrb[0].mxu0
        %v938 = vadd.f32 %v868, %v937
        %939 = vmatprep.mubr.bf16.mxu0 0
        %940 = vmatmul.mubr.bf16.gmra.mrb[0].mxu0 %v895
        %v941 = vpop.f32.mrb[0].mxu0
        %v942 = vadd.f32 %v873, %v941
        %v943 = vpop.f32.mrb[0].mxu0
        %v944 = vadd.f32 %v873, %v943
        %v945 = vpop.f32.mrb[0].mxu0
        %v946 = vadd.f32 %v878, %v945
        %v947 = vpop.f32.mrb[0].mxu0
        %v948 = vadd.f32 %v878, %v947
        %949 = vdwg.mxu0
        %950 = vmatprep.subr.bf16.mxu0 %v827
        %951 = vmatpush1.bf16.msra.mxu0 %v826
        %952 = vmatprep.subr.bf16.mxu0 %v835
        %953 = vmatpush1.bf16.msra.mxu0 %v834
        %954 = vmatprep.subr.bf16.mxu0 %v843
        %955 = vmatpush1.bf16.msra.mxu0 %v842
        %956 = vmatprep.subr.bf16.mxu0 %v851
        %957 = vmatpush1.bf16.msra.mxu0 %v850
        %958 = vmatprep.subr.bf16.mxu0 0
        %959 = vmatpush1.bf16.msra.mxu0 0
        %960 = vmatprep.subr.bf16.mxu0 0
        %961 = vmatpush1.bf16.msra.mxu0 0
        %962 = vmatprep.subr.bf16.mxu0 0
        %963 = vmatpush1.bf16.msra.mxu0 0
        %964 = vmatprep.subr.bf16.mxu0 0
        %965 = vmatpush1.bf16.msra.mxu0 0
        %966 = vmatprep.subr.bf16.mxu0 0
        %967 = vmatpush1.bf16.msra.mxu0 0
        %968 = vmatprep.subr.bf16.mxu0 0
        %969 = vmatpush1.bf16.msra.mxu0 0
        %970 = vmatprep.subr.bf16.mxu0 0
        %971 = vmatpush1.bf16.msra.mxu0 0
        %972 = vmatprep.subr.bf16.mxu0 0
        %973 = vmatpush1.bf16.msra.mxu0 0
        %974 = vmatprep.subr.bf16.mxu0 0
        %975 = vmatpush1.bf16.msra.mxu0 0
        %976 = vmatprep.subr.bf16.mxu0 0
        %977 = vmatpush1.bf16.msra.mxu0 0
        %978 = vmatprep.subr.bf16.mxu0 0
        %979 = vmatpush1.bf16.msra.mxu0 0
        %980 = vmatprep.subr.bf16.mxu0 0
        %981 = vmatpush1.bf16.msra.mxu0 0
        %982 = vmatprep.mubr.bf16.mxu0 0
        %983 = vmatmul.mubr.bf16.gmra.mrb[0].mxu0 %v892
        %v984 = vpop.f32.mrb[0].mxu0
        %v985 = vadd.f32 %v863, %v984
        %v986 = vpop.f32.mrb[0].mxu0
        %v987 = vadd.f32 %v863, %v986
        %v988 = vpop.f32.mrb[0].mxu0
        %v989 = vadd.f32 %v868, %v988
        %v990 = vpop.f32.mrb[0].mxu0
        %v991 = vadd.f32 %v868, %v990
        %992 = vmatprep.mubr.bf16.mxu0 0
        %993 = vmatmul.mubr.bf16.gmra.mrb[0].mxu0 %v895
        %v994 = vpop.f32.mrb[0].mxu0
        %v995 = vadd.f32 %v873, %v994
        %v996 = vpop.f32.mrb[0].mxu0
        %v997 = vadd.f32 %v873, %v996
        %v998 = vpop.f32.mrb[0].mxu0
        %v999 = vadd.f32 %v878, %v998
        %v1000 = vpop.f32.mrb[0].mxu0
        %v1001 = vadd.f32 %v878, %v1000
        %1002 = vdwg.mxu0
        %1003 = vmatprep.subr.bf16.mxu0 %v829
        %1004 = vmatpush1.bf16.msra.mxu0 %v828
        %1005 = vmatprep.subr.bf16.mxu0 %v837
        %1006 = vmatpush1.bf16.msra.mxu0 %v836
        %1007 = vmatprep.subr.bf16.mxu0 %v845
        %1008 = vmatpush1.bf16.msra.mxu0 %v844
        %1009 = vmatprep.subr.bf16.mxu0 %v853
        %1010 = vmatpush1.bf16.msra.mxu0 %v852
        %1011 = vmatprep.subr.bf16.mxu0 0
        %1012 = vmatpush1.bf16.msra.mxu0 0
        %1013 = vmatprep.subr.bf16.mxu0 0
        %1014 = vmatpush1.bf16.msra.mxu0 0
        %1015 = vmatprep.subr.bf16.mxu0 0
        %1016 = vmatpush1.bf16.msra.mxu0 0
        %1017 = vmatprep.subr.bf16.mxu0 0
        %1018 = vmatpush1.bf16.msra.mxu0 0
        %1019 = vmatprep.subr.bf16.mxu0 0
        %1020 = vmatpush1.bf16.msra.mxu0 0
        %1021 = vmatprep.subr.bf16.mxu0 0
        %1022 = vmatpush1.bf16.msra.mxu0 0
        %1023 = vmatprep.subr.bf16.mxu0 0
        %1024 = vmatpush1.bf16.msra.mxu0 0
        %1025 = vmatprep.subr.bf16.mxu0 0
        %1026 = vmatpush1.bf16.msra.mxu0 0
        %1027 = vmatprep.subr.bf16.mxu0 0
        %1028 = vmatpush1.bf16.msra.mxu0 0
        %1029 = vmatprep.subr.bf16.mxu0 0
        %1030 = vmatpush1.bf16.msra.mxu0 0
        %1031 = vmatprep.subr.bf16.mxu0 0
        %1032 = vmatpush1.bf16.msra.mxu0 0
        %1033 = vmatprep.subr.bf16.mxu0 0
        %1034 = vmatpush1.bf16.msra.mxu0 0
        %1035 = vmatprep.mubr.bf16.mxu0 0
        %1036 = vmatmul.mubr.bf16.gmra.mrb[0].mxu0 %v892
        %v1037 = vpop.f32.mrb[0].mxu0
        %v1038 = vadd.f32 %v863, %v1037
        %v1039 = vpop.f32.mrb[0].mxu0
        %v1040 = vadd.f32 %v863, %v1039
        %v1041 = vpop.f32.mrb[0].mxu0
        %v1042 = vadd.f32 %v868, %v1041
        %v1043 = vpop.f32.mrb[0].mxu0
        %v1044 = vadd.f32 %v868, %v1043
        %1045 = vmatprep.mubr.bf16.mxu0 0
        %1046 = vmatmul.mubr.bf16.gmra.mrb[0].mxu0 %v895
        %v1047 = vpop.f32.mrb[0].mxu0
        %v1048 = vadd.f32 %v873, %v1047
        %v1049 = vpop.f32.mrb[0].mxu0
        %v1050 = vadd.f32 %v873, %v1049
        %v1051 = vpop.f32.mrb[0].mxu0
        %v1052 = vadd.f32 %v878, %v1051
        %v1053 = vpop.f32.mrb[0].mxu0
        %v1054 = vadd.f32 %v878, %v1053
        %1055 = vdwg.mxu0
        %1056 = vmatprep.subr.bf16.mxu0 %v831
        %1057 = vmatpush1.bf16.msra.mxu0 %v830
        %1058 = vmatprep.subr.bf16.mxu0 %v839
        %1059 = vmatpush1.bf16.msra.mxu0 %v838
        %1060 = vmatprep.subr.bf16.mxu0 %v847
        %1061 = vmatpush1.bf16.msra.mxu0 %v846
        %1062 = vmatprep.subr.bf16.mxu0 %v855
        %1063 = vmatpush1.bf16.msra.mxu0 %v854
        %1064 = vmatprep.subr.bf16.mxu0 0
        %1065 = vmatpush1.bf16.msra.mxu0 0
        %1066 = vmatprep.subr.bf16.mxu0 0
        %1067 = vmatpush1.bf16.msra.mxu0 0
        %1068 = vmatprep.subr.bf16.mxu0 0
        %1069 = vmatpush1.bf16.msra.mxu0 0
        %1070 = vmatprep.subr.bf16.mxu0 0
        %1071 = vmatpush1.bf16.msra.mxu0 0
        %1072 = vmatprep.subr.bf16.mxu0 0
        %1073 = vmatpush1.bf16.msra.mxu0 0
        %1074 = vmatprep.subr.bf16.mxu0 0
        %1075 = vmatpush1.bf16.msra.mxu0 0
        %1076 = vmatprep.subr.bf16.mxu0 0
        %1077 = vmatpush1.bf16.msra.mxu0 0
        %1078 = vmatprep.subr.bf16.mxu0 0
        %1079 = vmatpush1.bf16.msra.mxu0 0
        %1080 = vmatprep.subr.bf16.mxu0 0
        %1081 = vmatpush1.bf16.msra.mxu0 0
        %1082 = vmatprep.subr.bf16.mxu0 0
        %1083 = vmatpush1.bf16.msra.mxu0 0
        %1084 = vmatprep.subr.bf16.mxu0 0
        %1085 = vmatpush1.bf16.msra.mxu0 0
        %1086 = vmatprep.subr.bf16.mxu0 0
        %1087 = vmatpush1.bf16.msra.mxu0 0
        %1088 = vmatprep.mubr.bf16.mxu0 0
        %1089 = vmatmul.mubr.bf16.gmra.mrb[0].mxu0 %v892
        %v1090 = vpop.f32.mrb[0].mxu0
        %v1091 = vadd.f32 %v863, %v1090
        %v1092 = vpop.f32.mrb[0].mxu0
        %v1093 = vadd.f32 %v863, %v1092
        %v1094 = vpop.f32.mrb[0].mxu0
        %v1095 = vadd.f32 %v868, %v1094
        %v1096 = vpop.f32.mrb[0].mxu0
        %v1097 = vadd.f32 %v868, %v1096
        %1098 = vmatprep.mubr.bf16.mxu0 0
        %1099 = vmatmul.mubr.bf16.gmra.mrb[0].mxu0 %v895
        %v1100 = vpop.f32.mrb[0].mxu0
        %v1101 = vadd.f32 %v873, %v1100
        %v1102 = vpop.f32.mrb[0].mxu0
        %v1103 = vadd.f32 %v873, %v1102
        %v1104 = vpop.f32.mrb[0].mxu0
        %v1105 = vadd.f32 %v878, %v1104
        %v1106 = vpop.f32.mrb[0].mxu0
        %v1107 = vadd.f32 %v878, %v1106
        %1108 = vdwg.mxu0
        %v1109 = vmax.f32 %v932, 0.0
        %v1110 = vmax.f32 %v934, 0.0
        %v1111 = vmax.f32 %v985, 0.0
        %v1112 = vmax.f32 %v987, 0.0
        %v1113 = vmax.f32 %v1038, 0.0
        %v1114 = vmax.f32 %v1040, 0.0
        %v1115 = vmax.f32 %v1091, 0.0
        %v1116 = vmax.f32 %v1093, 0.0
        %v1117 = vmax.f32 %v936, 0.0
        %v1118 = vmax.f32 %v938, 0.0
        %v1119 = vmax.f32 %v989, 0.0
        %v1120 = vmax.f32 %v991, 0.0
        %v1121 = vmax.f32 %v1042, 0.0
        %v1122 = vmax.f32 %v1044, 0.0
        %v1123 = vmax.f32 %v1095, 0.0
        %v1124 = vmax.f32 %v1097, 0.0
        %v1125 = vmax.f32 %v942, 0.0
        %v1126 = vmax.f32 %v944, 0.0
        %v1127 = vmax.f32 %v995, 0.0
        %v1128 = vmax.f32 %v997, 0.0
        %v1129 = vmax.f32 %v1048, 0.0
        %v1130 = vmax.f32 %v1050, 0.0
        %v1131 = vmax.f32 %v1101, 0.0
        %v1132 = vmax.f32 %v1103, 0.0
        %v1133 = vmax.f32 %v946, 0.0
        %v1134 = vmax.f32 %v948, 0.0
        %v1135 = vmax.f32 %v999, 0.0
        %v1136 = vmax.f32 %v1001, 0.0
        %v1137 = vmax.f32 %v1052, 0.0
        %v1138 = vmax.f32 %v1054, 0.0
        %v1139 = vmax.f32 %v1105, 0.0
        %v1140 = vmax.f32 %v1107, 0.0
        %v1141 = vld [vmem:[%s1 + $0x30] sm:$0xf]
        %v1142 = vld [vmem:[%s1 + $0x34] sm:$0xf]
        %v1143 = vpack.c.bf16 %v1117, %v1109
        %v1144 = vpack.c.bf16 %v1118, %v1110
        %v1145 = vpack.c.bf16 %v1119, %v1111
        %v1146 = vpack.c.bf16 %v1120, %v1112
        %v1147 = vpack.c.bf16 %v1121, %v1113
        %v1148 = vpack.c.bf16 %v1122, %v1114
        %v1149 = vpack.c.bf16 %v1123, %v1115
        %v1150 = vpack.c.bf16 %v1124, %v1116
        %v1151 = vpack.c.bf16 %v1133, %v1125
        %v1152 = vpack.c.bf16 %v1134, %v1126
        %v1153 = vpack.c.bf16 %v1135, %v1127
        %v1154 = vpack.c.bf16 %v1136, %v1128
        %v1155 = vpack.c.bf16 %v1137, %v1129
        %v1156 = vpack.c.bf16 %v1138, %v1130
        %v1157 = vpack.c.bf16 %v1139, %v1131
        %v1158 = vpack.c.bf16 %v1140, %v1132
        %v1159 = vld [vmem:[%s2 + $0x60] sm:$0xff]
        %v1160 = vld [vmem:[%s2 + $0x68] sm:$0xff]
        %1162 = vset.pattern.permute.xlu0 0
        %1163 = vperm.xlu0 %1162, %v1159
        %v1164 = vpop.permute.xlu0 %1163
        %1167 = vset.pattern.permute.xlu0 0
        %1168 = vperm.xlu0 %1167, %v1160
        %v1169 = vpop.permute.xlu0 %1168
        %v1173 = vunpack.c.l.b16 %v1141
        %v1174 = vunpack.c.l.b16 %v1142
        %v1175 = vpack.c.b16 %v1174, %v1173
        %vm1176 = vcmask 261120
        %v1178 = vsel %vm1176, %v1175, 0
        %1180 = vmatprep.subr.bf16.mxu0 %v1144
        %1181 = vmatpush1.bf16.msra.mxu0 %v1143
        %1182 = vmatprep.subr.bf16.mxu0 %v1152
        %1183 = vmatpush1.bf16.msra.mxu0 %v1151
        %1184 = vmatprep.subr.bf16.mxu0 0
        %1185 = vmatpush1.bf16.msra.mxu0 0
        %1186 = vmatprep.subr.bf16.mxu0 0
        %1187 = vmatpush1.bf16.msra.mxu0 0
        %1188 = vmatprep.subr.bf16.mxu0 0
        %1189 = vmatpush1.bf16.msra.mxu0 0
        %1190 = vmatprep.subr.bf16.mxu0 0
        %1191 = vmatpush1.bf16.msra.mxu0 0
        %1192 = vmatprep.subr.bf16.mxu0 0
        %1193 = vmatpush1.bf16.msra.mxu0 0
        %1194 = vmatprep.subr.bf16.mxu0 0
        %1195 = vmatpush1.bf16.msra.mxu0 0
        %1196 = vmatprep.subr.bf16.mxu0 0
        %1197 = vmatpush1.bf16.msra.mxu0 0
        %1198 = vmatprep.subr.bf16.mxu0 0
        %1199 = vmatpush1.bf16.msra.mxu0 0
        %1200 = vmatprep.subr.bf16.mxu0 0
        %1201 = vmatpush1.bf16.msra.mxu0 0
        %1202 = vmatprep.subr.bf16.mxu0 0
        %1203 = vmatpush1.bf16.msra.mxu0 0
        %1204 = vmatprep.subr.bf16.mxu0 0
        %1205 = vmatpush1.bf16.msra.mxu0 0
        %1206 = vmatprep.subr.bf16.mxu0 0
        %1207 = vmatpush1.bf16.msra.mxu0 0
        %1208 = vmatprep.subr.bf16.mxu0 0
        %1209 = vmatpush1.bf16.msra.mxu0 0
        %1210 = vmatprep.subr.bf16.mxu0 0
        %1211 = vmatpush1.bf16.msra.mxu0 0
        %1212 = vmatprep.mubr.bf16.mxu0 0
        %1213 = vmatmul.mubr.bf16.gmra.mrb[0].mxu0 %v1178
        %v1214 = vpop.f32.mrb[0].mxu0
        %v1215 = vadd.f32 %v1164, %v1214
        %v1216 = vpop.f32.mrb[0].mxu0
        %v1217 = vadd.f32 %v1164, %v1216
        %v1218 = vpop.f32.mrb[0].mxu0
        %v1219 = vadd.f32 %v1169, %v1218
        %v1220 = vpop.f32.mrb[0].mxu0
        %v1221 = vadd.f32 %v1169, %v1220
        %1222 = vdwg.mxu0
        %1223 = vmatprep.subr.bf16.mxu0 %v1146
        %1224 = vmatpush1.bf16.msra.mxu0 %v1145
        %1225 = vmatprep.subr.bf16.mxu0 %v1154
        %1226 = vmatpush1.bf16.msra.mxu0 %v1153
        %1227 = vmatprep.subr.bf16.mxu0 0
        %1228 = vmatpush1.bf16.msra.mxu0 0
        %1229 = vmatprep.subr.bf16.mxu0 0
        %1230 = vmatpush1.bf16.msra.mxu0 0
        %1231 = vmatprep.subr.bf16.mxu0 0
        %1232 = vmatpush1.bf16.msra.mxu0 0
        %1233 = vmatprep.subr.bf16.mxu0 0
        %1234 = vmatpush1.bf16.msra.mxu0 0
        %1235 = vmatprep.subr.bf16.mxu0 0
        %1236 = vmatpush1.bf16.msra.mxu0 0
        %1237 = vmatprep.subr.bf16.mxu0 0
        %1238 = vmatpush1.bf16.msra.mxu0 0
        %1239 = vmatprep.subr.bf16.mxu0 0
        %1240 = vmatpush1.bf16.msra.mxu0 0
        %1241 = vmatprep.subr.bf16.mxu0 0
        %1242 = vmatpush1.bf16.msra.mxu0 0
        %1243 = vmatprep.subr.bf16.mxu0 0
        %1244 = vmatpush1.bf16.msra.mxu0 0
        %1245 = vmatprep.subr.bf16.mxu0 0
        %1246 = vmatpush1.bf16.msra.mxu0 0
        %1247 = vmatprep.subr.bf16.mxu0 0
        %1248 = vmatpush1.bf16.msra.mxu0 0
        %1249 = vmatprep.subr.bf16.mxu0 0
        %1250 = vmatpush1.bf16.msra.mxu0 0
        %1251 = vmatprep.subr.bf16.mxu0 0
        %1252 = vmatpush1.bf16.msra.mxu0 0
        %1253 = vmatprep.subr.bf16.mxu0 0
        %1254 = vmatpush1.bf16.msra.mxu0 0
        %1255 = vmatprep.mubr.bf16.mxu0 0
        %1256 = vmatmul.mubr.bf16.gmra.mrb[0].mxu0 %v1178
        %v1257 = vpop.f32.mrb[0].mxu0
        %v1258 = vadd.f32 %v1164, %v1257
        %v1259 = vpop.f32.mrb[0].mxu0
        %v1260 = vadd.f32 %v1164, %v1259
        %v1261 = vpop.f32.mrb[0].mxu0
        %v1262 = vadd.f32 %v1169, %v1261
        %v1263 = vpop.f32.mrb[0].mxu0
        %v1264 = vadd.f32 %v1169, %v1263
        %1265 = vdwg.mxu0
        %1266 = vmatprep.subr.bf16.mxu0 %v1148
        %1267 = vmatpush1.bf16.msra.mxu0 %v1147
        %1268 = vmatprep.subr.bf16.mxu0 %v1156
        %1269 = vmatpush1.bf16.msra.mxu0 %v1155
        %1270 = vmatprep.subr.bf16.mxu0 0
        %1271 = vmatpush1.bf16.msra.mxu0 0
        %1272 = vmatprep.subr.bf16.mxu0 0
        %1273 = vmatpush1.bf16.msra.mxu0 0
        %1274 = vmatprep.subr.bf16.mxu0 0
        %1275 = vmatpush1.bf16.msra.mxu0 0
        %1276 = vmatprep.subr.bf16.mxu0 0
        %1277 = vmatpush1.bf16.msra.mxu0 0
        %1278 = vmatprep.subr.bf16.mxu0 0
        %1279 = vmatpush1.bf16.msra.mxu0 0
        %1280 = vmatprep.subr.bf16.mxu0 0
        %1281 = vmatpush1.bf16.msra.mxu0 0
        %1282 = vmatprep.subr.bf16.mxu0 0
        %1283 = vmatpush1.bf16.msra.mxu0 0
        %1284 = vmatprep.subr.bf16.mxu0 0
        %1285 = vmatpush1.bf16.msra.mxu0 0
        %1286 = vmatprep.subr.bf16.mxu0 0
        %1287 = vmatpush1.bf16.msra.mxu0 0
        %1288 = vmatprep.subr.bf16.mxu0 0
        %1289 = vmatpush1.bf16.msra.mxu0 0
        %1290 = vmatprep.subr.bf16.mxu0 0
        %1291 = vmatpush1.bf16.msra.mxu0 0
        %1292 = vmatprep.subr.bf16.mxu0 0
        %1293 = vmatpush1.bf16.msra.mxu0 0
        %1294 = vmatprep.subr.bf16.mxu0 0
        %1295 = vmatpush1.bf16.msra.mxu0 0
        %1296 = vmatprep.subr.bf16.mxu0 0
        %1297 = vmatpush1.bf16.msra.mxu0 0
        %1298 = vmatprep.mubr.bf16.mxu0 0
        %1299 = vmatmul.mubr.bf16.gmra.mrb[0].mxu0 %v1178
        %v1300 = vpop.f32.mrb[0].mxu0
        %v1301 = vadd.f32 %v1164, %v1300
        %v1302 = vpop.f32.mrb[0].mxu0
        %v1303 = vadd.f32 %v1164, %v1302
        %v1304 = vpop.f32.mrb[0].mxu0
        %v1305 = vadd.f32 %v1169, %v1304
        %v1306 = vpop.f32.mrb[0].mxu0
        %v1307 = vadd.f32 %v1169, %v1306
        %1308 = vdwg.mxu0
        %1309 = vmatprep.subr.bf16.mxu0 %v1150
        %1310 = vmatpush1.bf16.msra.mxu0 %v1149
        %1311 = vmatprep.subr.bf16.mxu0 %v1158
        %1312 = vmatpush1.bf16.msra.mxu0 %v1157
        %1313 = vmatprep.subr.bf16.mxu0 0
        %1314 = vmatpush1.bf16.msra.mxu0 0
        %1315 = vmatprep.subr.bf16.mxu0 0
        %1316 = vmatpush1.bf16.msra.mxu0 0
        %1317 = vmatprep.subr.bf16.mxu0 0
        %1318 = vmatpush1.bf16.msra.mxu0 0
        %1319 = vmatprep.subr.bf16.mxu0 0
        %1320 = vmatpush1.bf16.msra.mxu0 0
        %1321 = vmatprep.subr.bf16.mxu0 0
        %1322 = vmatpush1.bf16.msra.mxu0 0
        %1323 = vmatprep.subr.bf16.mxu0 0
        %1324 = vmatpush1.bf16.msra.mxu0 0
        %1325 = vmatprep.subr.bf16.mxu0 0
        %1326 = vmatpush1.bf16.msra.mxu0 0
        %1327 = vmatprep.subr.bf16.mxu0 0
        %1328 = vmatpush1.bf16.msra.mxu0 0
        %1329 = vmatprep.subr.bf16.mxu0 0
        %1330 = vmatpush1.bf16.msra.mxu0 0
        %1331 = vmatprep.subr.bf16.mxu0 0
        %1332 = vmatpush1.bf16.msra.mxu0 0
        %1333 = vmatprep.subr.bf16.mxu0 0
        %1334 = vmatpush1.bf16.msra.mxu0 0
        %1335 = vmatprep.subr.bf16.mxu0 0
        %1336 = vmatpush1.bf16.msra.mxu0 0
        %1337 = vmatprep.subr.bf16.mxu0 0
        %1338 = vmatpush1.bf16.msra.mxu0 0
        %1339 = vmatprep.subr.bf16.mxu0 0
        %1340 = vmatpush1.bf16.msra.mxu0 0
        %1341 = vmatprep.mubr.bf16.mxu0 0
        %1342 = vmatmul.mubr.bf16.gmra.mrb[0].mxu0 %v1178
        %v1343 = vpop.f32.mrb[0].mxu0
        %v1344 = vadd.f32 %v1164, %v1343
        %v1345 = vpop.f32.mrb[0].mxu0
        %v1346 = vadd.f32 %v1164, %v1345
        %v1347 = vpop.f32.mrb[0].mxu0
        %v1348 = vadd.f32 %v1169, %v1347
        %v1349 = vpop.f32.mrb[0].mxu0
        %v1350 = vadd.f32 %v1169, %v1349
        %1351 = vdwg.mxu0
        %v1352 = vmax.f32 %v1215, 0.0
        %v1353 = vmax.f32 %v1217, 0.0
        %v1354 = vmax.f32 %v1258, 0.0
        %v1355 = vmax.f32 %v1260, 0.0
        %v1356 = vmax.f32 %v1301, 0.0
        %v1357 = vmax.f32 %v1303, 0.0
        %v1358 = vmax.f32 %v1344, 0.0
        %v1359 = vmax.f32 %v1346, 0.0
        %v1360 = vmax.f32 %v1219, 0.0
        %v1361 = vmax.f32 %v1221, 0.0
        %v1362 = vmax.f32 %v1262, 0.0
        %v1363 = vmax.f32 %v1264, 0.0
        %v1364 = vmax.f32 %v1305, 0.0
        %v1365 = vmax.f32 %v1307, 0.0
        %v1366 = vmax.f32 %v1348, 0.0
        %v1367 = vmax.f32 %v1350, 0.0
        %v1368 = vld [vmem:[%s1 + $0x38] sm:$0xf]
        %v1369 = vpack.c.bf16 %v1360, %v1352
        %v1370 = vpack.c.bf16 %v1361, %v1353
        %v1371 = vpack.c.bf16 %v1362, %v1354
        %v1372 = vpack.c.bf16 %v1363, %v1355
        %v1373 = vpack.c.bf16 %v1364, %v1356
        %v1374 = vpack.c.bf16 %v1365, %v1357
        %v1375 = vpack.c.bf16 %v1366, %v1358
        %v1376 = vpack.c.bf16 %v1367, %v1359
        %v1377 = vld [vmem:[%s2 + $0x70] sm:$0xff]
        %1379 = vset.pattern.permute.xlu0 0
        %1380 = vperm.xlu0 %1379, %v1377
        %v1381 = vpop.permute.xlu0 %1380
        %vm1383 = vcmask 130048
        %v1385 = vsel %vm1383, %v1368, 0
        %1387 = vmatprep.subr.bf16.mxu0 %v1370
        %1388 = vmatpush1.bf16.msra.mxu0 %v1369
        %1389 = vmatprep.subr.bf16.mxu0 0
        %1390 = vmatpush1.bf16.msra.mxu0 0
        %1391 = vmatprep.subr.bf16.mxu0 0
        %1392 = vmatpush1.bf16.msra.mxu0 0
        %1393 = vmatprep.subr.bf16.mxu0 0
        %1394 = vmatpush1.bf16.msra.mxu0 0
        %1395 = vmatprep.subr.bf16.mxu0 0
        %1396 = vmatpush1.bf16.msra.mxu0 0
        %1397 = vmatprep.subr.bf16.mxu0 0
        %1398 = vmatpush1.bf16.msra.mxu0 0
        %1399 = vmatprep.subr.bf16.mxu0 0
        %1400 = vmatpush1.bf16.msra.mxu0 0
        %1401 = vmatprep.subr.bf16.mxu0 0
        %1402 = vmatpush1.bf16.msra.mxu0 0
        %1403 = vmatprep.subr.bf16.mxu0 0
        %1404 = vmatpush1.bf16.msra.mxu0 0
        %1405 = vmatprep.subr.bf16.mxu0 0
        %1406 = vmatpush1.bf16.msra.mxu0 0
        %1407 = vmatprep.subr.bf16.mxu0 0
        %1408 = vmatpush1.bf16.msra.mxu0 0
        %1409 = vmatprep.subr.bf16.mxu0 0
        %1410 = vmatpush1.bf16.msra.mxu0 0
        %1411 = vmatprep.subr.bf16.mxu0 0
        %1412 = vmatpush1.bf16.msra.mxu0 0
        %1413 = vmatprep.subr.bf16.mxu0 0
        %1414 = vmatpush1.bf16.msra.mxu0 0
        %1415 = vmatprep.subr.bf16.mxu0 0
        %1416 = vmatpush1.bf16.msra.mxu0 0
        %1417 = vmatprep.subr.bf16.mxu0 0
        %1418 = vmatpush1.bf16.msra.mxu0 0
        %1419 = vmatprep.mubr.bf16.mxu0 0
        %1420 = vmatmul.mubr.bf16.gmra.mrb[0].mxu0 %v1385
        %v1421 = vpop.f32.mrb[0].mxu0
        %v1422 = vadd.f32 %v1381, %v1421
        %v1423 = vpop.f32.mrb[0].mxu0
        %v1424 = vadd.f32 %v1381, %v1423
        %v1425 = vpop.f32.mrb[0].mxu0
        %v1426 = vpop.f32.mrb[0].mxu0
        %1427 = vdwg.mxu0
        %1428 = vmatprep.subr.bf16.mxu0 %v1372
        %1429 = vmatpush1.bf16.msra.mxu0 %v1371
        %1430 = vmatprep.subr.bf16.mxu0 0
        %1431 = vmatpush1.bf16.msra.mxu0 0
        %1432 = vmatprep.subr.bf16.mxu0 0
        %1433 = vmatpush1.bf16.msra.mxu0 0
        %1434 = vmatprep.subr.bf16.mxu0 0
        %1435 = vmatpush1.bf16.msra.mxu0 0
        %1436 = vmatprep.subr.bf16.mxu0 0
        %1437 = vmatpush1.bf16.msra.mxu0 0
        %1438 = vmatprep.subr.bf16.mxu0 0
        %1439 = vmatpush1.bf16.msra.mxu0 0
        %1440 = vmatprep.subr.bf16.mxu0 0
        %1441 = vmatpush1.bf16.msra.mxu0 0
        %1442 = vmatprep.subr.bf16.mxu0 0
        %1443 = vmatpush1.bf16.msra.mxu0 0
        %1444 = vmatprep.subr.bf16.mxu0 0
        %1445 = vmatpush1.bf16.msra.mxu0 0
        %1446 = vmatprep.subr.bf16.mxu0 0
        %1447 = vmatpush1.bf16.msra.mxu0 0
        %1448 = vmatprep.subr.bf16.mxu0 0
        %1449 = vmatpush1.bf16.msra.mxu0 0
        %1450 = vmatprep.subr.bf16.mxu0 0
        %1451 = vmatpush1.bf16.msra.mxu0 0
        %1452 = vmatprep.subr.bf16.mxu0 0
        %1453 = vmatpush1.bf16.msra.mxu0 0
        %1454 = vmatprep.subr.bf16.mxu0 0
        %1455 = vmatpush1.bf16.msra.mxu0 0
        %1456 = vmatprep.subr.bf16.mxu0 0
        %1457 = vmatpush1.bf16.msra.mxu0 0
        %1458 = vmatprep.subr.bf16.mxu0 0
        %1459 = vmatpush1.bf16.msra.mxu0 0
        %1460 = vmatprep.mubr.bf16.mxu0 0
        %1461 = vmatmul.mubr.bf16.gmra.mrb[0].mxu0 %v1385
        %v1462 = vpop.f32.mrb[0].mxu0
        %v1463 = vadd.f32 %v1381, %v1462
        %v1464 = vpop.f32.mrb[0].mxu0
        %v1465 = vadd.f32 %v1381, %v1464
        %v1466 = vpop.f32.mrb[0].mxu0
        %v1467 = vpop.f32.mrb[0].mxu0
        %1468 = vdwg.mxu0
        %1469 = vmatprep.subr.bf16.mxu0 %v1374
        %1470 = vmatpush1.bf16.msra.mxu0 %v1373
        %1471 = vmatprep.subr.bf16.mxu0 0
        %1472 = vmatpush1.bf16.msra.mxu0 0
        %1473 = vmatprep.subr.bf16.mxu0 0
        %1474 = vmatpush1.bf16.msra.mxu0 0
        %1475 = vmatprep.subr.bf16.mxu0 0
        %1476 = vmatpush1.bf16.msra.mxu0 0
        %1477 = vmatprep.subr.bf16.mxu0 0
        %1478 = vmatpush1.bf16.msra.mxu0 0
        %1479 = vmatprep.subr.bf16.mxu0 0
        %1480 = vmatpush1.bf16.msra.mxu0 0
        %1481 = vmatprep.subr.bf16.mxu0 0
        %1482 = vmatpush1.bf16.msra.mxu0 0
        %1483 = vmatprep.subr.bf16.mxu0 0
        %1484 = vmatpush1.bf16.msra.mxu0 0
        %1485 = vmatprep.subr.bf16.mxu0 0
        %1486 = vmatpush1.bf16.msra.mxu0 0
        %1487 = vmatprep.subr.bf16.mxu0 0
        %1488 = vmatpush1.bf16.msra.mxu0 0
        %1489 = vmatprep.subr.bf16.mxu0 0
        %1490 = vmatpush1.bf16.msra.mxu0 0
        %1491 = vmatprep.subr.bf16.mxu0 0
        %1492 = vmatpush1.bf16.msra.mxu0 0
        %1493 = vmatprep.subr.bf16.mxu0 0
        %1494 = vmatpush1.bf16.msra.mxu0 0
        %1495 = vmatprep.subr.bf16.mxu0 0
        %1496 = vmatpush1.bf16.msra.mxu0 0
        %1497 = vmatprep.subr.bf16.mxu0 0
        %1498 = vmatpush1.bf16.msra.mxu0 0
        %1499 = vmatprep.subr.bf16.mxu0 0
        %1500 = vmatpush1.bf16.msra.mxu0 0
        %1501 = vmatprep.mubr.bf16.mxu0 0
        %1502 = vmatmul.mubr.bf16.gmra.mrb[0].mxu0 %v1385
        %v1503 = vpop.f32.mrb[0].mxu0
        %v1504 = vadd.f32 %v1381, %v1503
        %v1505 = vpop.f32.mrb[0].mxu0
        %v1506 = vadd.f32 %v1381, %v1505
        %v1507 = vpop.f32.mrb[0].mxu0
        %v1508 = vpop.f32.mrb[0].mxu0
        %1509 = vdwg.mxu0
        %1510 = vmatprep.subr.bf16.mxu0 %v1376
        %1511 = vmatpush1.bf16.msra.mxu0 %v1375
        %1512 = vmatprep.subr.bf16.mxu0 0
        %1513 = vmatpush1.bf16.msra.mxu0 0
        %1514 = vmatprep.subr.bf16.mxu0 0
        %1515 = vmatpush1.bf16.msra.mxu0 0
        %1516 = vmatprep.subr.bf16.mxu0 0
        %1517 = vmatpush1.bf16.msra.mxu0 0
        %1518 = vmatprep.subr.bf16.mxu0 0
        %1519 = vmatpush1.bf16.msra.mxu0 0
        %1520 = vmatprep.subr.bf16.mxu0 0
        %1521 = vmatpush1.bf16.msra.mxu0 0
        %1522 = vmatprep.subr.bf16.mxu0 0
        %1523 = vmatpush1.bf16.msra.mxu0 0
        %1524 = vmatprep.subr.bf16.mxu0 0
        %1525 = vmatpush1.bf16.msra.mxu0 0
        %1526 = vmatprep.subr.bf16.mxu0 0
        %1527 = vmatpush1.bf16.msra.mxu0 0
        %1528 = vmatprep.subr.bf16.mxu0 0
        %1529 = vmatpush1.bf16.msra.mxu0 0
        %1530 = vmatprep.subr.bf16.mxu0 0
        %1531 = vmatpush1.bf16.msra.mxu0 0
        %1532 = vmatprep.subr.bf16.mxu0 0
        %1533 = vmatpush1.bf16.msra.mxu0 0
        %1534 = vmatprep.subr.bf16.mxu0 0
        %1535 = vmatpush1.bf16.msra.mxu0 0
        %1536 = vmatprep.subr.bf16.mxu0 0
        %1537 = vmatpush1.bf16.msra.mxu0 0
        %1538 = vmatprep.subr.bf16.mxu0 0
        %1539 = vmatpush1.bf16.msra.mxu0 0
        %1540 = vmatprep.subr.bf16.mxu0 0
        %1541 = vmatpush1.bf16.msra.mxu0 0
        %1542 = vmatprep.mubr.bf16.mxu0 0
        %1543 = vmatmul.mubr.bf16.gmra.mrb[0].mxu0 %v1385
        %v1544 = vpop.f32.mrb[0].mxu0
        %v1545 = vadd.f32 %v1381, %v1544
        %v1546 = vpop.f32.mrb[0].mxu0
        %v1547 = vadd.f32 %v1381, %v1546
        %v1548 = vpop.f32.mrb[0].mxu0
        %v1549 = vpop.f32.mrb[0].mxu0
        %1550 = vdwg.mxu0
        %v1551 = vmax.f32 %v1422, 0.0
        %v1552 = vmax.f32 %v1424, 0.0
        %v1553 = vmax.f32 %v1463, 0.0
        %v1554 = vmax.f32 %v1465, 0.0
        %v1555 = vmax.f32 %v1504, 0.0
        %v1556 = vmax.f32 %v1506, 0.0
        %v1557 = vmax.f32 %v1545, 0.0
        %v1558 = vmax.f32 %v1547, 0.0
        %1559 = vst [vmem:[%s188] sm:$0xff] %v1551
        %1560 = vst [vmem:[%s188 + $0x8] sm:$0xff] %v1552
        %1561 = vst [vmem:[%s188 + $0x10] sm:$0xff] %v1553
        %1562 = vst [vmem:[%s188 + $0x18] sm:$0xff] %v1554
        %1563 = vst [vmem:[%s188 + $0x20] sm:$0xff] %v1555
        %1564 = vst [vmem:[%s188 + $0x28] sm:$0xff] %v1556
        %1565 = vst [vmem:[%s188 + $0x30] sm:$0xff] %v1557
        %1566 = vst [vmem:[%s188 + $0x38] sm:$0xff] %v1558
        %s1567 = sand.u32 %s96, 1
        %s1568 = scalar_lea.sflag [#allocation4], %s1567
        %s1569 = sand.u32 %s96, 1
        %s1570 = smul.addr %s1569, 64
        %s1571 = scalar_lea.vmem [#allocation5], %s1570
        // Predicated region
        $region37: #{discriminator_forward_lanes.1} parent=31 // pred_check
          %p1572 = pneg %p106
        $region38: #{discriminator_forward_lanes.1} parent=31 // pred_check_branch
          %1574 = sbr.rel (%p1572) target = $region40
        $region39: #{discriminator_forward_lanes.1} parent=31 // pred_region
          %s1575 = smul.u32 8, %s20
          %s1577 = ssub.s32 1024, 1024
          %1578 = vsyncadd %s1568, %s1577
          %s1579 = smul.addr %s1575, 128
          %s1580 = scalar_lea.hbm %s3, %s1579
          %s1582 = sshll.u32 %s1571, 4
          %s1583 = int_to_ptr.vmem [resolvable:$true] %s1582
          %1585 = dma.vmem_to_hbm [thread:$0]  %s1583, 1024, %s1580, %s1568
        $region40: #{discriminator_forward_lanes.1} parent=31 // pred_fallthru
          _
      $region32: #{discriminator_forward_lanes.1} parent=5 // pred_fallthru
        _
      %p1586 = scmp.le.s32.totalorder 2, %s15
      // Predicated region
      $region41: #{discriminator_forward_lanes.1} parent=5 // pred_check
        %p1587 = pneg %p1586
      $region42: #{discriminator_forward_lanes.1} parent=5 // pred_check_branch
        %1589 = sbr.rel (%p1587) target = $region44
      $region43: #{discriminator_forward_lanes.1} parent=5 // pred_region
        %s1590 = ssub.s32 %s15, 2
        // Predicated region
        $region45: #{discriminator_forward_lanes.1} parent=43 // pred_check
          %p1591 = pneg %p112
        $region46: #{discriminator_forward_lanes.1} parent=43 // pred_check_branch
          %1593 = sbr.rel (%p1591) target = $region48
        $region47: #{discriminator_forward_lanes.1} parent=43 // pred_region
          %s1594 = sand.u32 %s97, 1
          %s1595 = scalar_lea.sflag [#allocation4], %s1594
          %s1596 = sand.u32 %s97, 1
          %s1597 = smul.addr %s1596, 64
          %s1598 = scalar_lea.vmem [#allocation5], %s1597
          %1599 = dma.done %s1595, 1024
        $region48: #{discriminator_forward_lanes.1} parent=43 // pred_fallthru
          _
      $region44: #{discriminator_forward_lanes.1} parent=5 // pred_fallthru
        _
    $region6: #{discriminator_forward_lanes.1} parent=1 // loop_footer
      %s19 = sadd.s32 1, %s15
    $region7: #{discriminator_forward_lanes.1} parent=1 // loop_footer_branch
      %14 = sbr.rel target = $region3
    $region8: #{discriminator_forward_lanes.1} parent=1 // loop_exit
      _
    %1600 = vsyncpa [#allocation3], 1
    %s1601 = scalar_lea.sflag [#allocation3], 1
    %1602 = vsyncpa %s1601, 1
    %1603 = vsyncpa [#allocation4], 1
    %s1604 = scalar_lea.sflag [#allocation4], 1
    %1605 = vsyncpa %s1604, 1

</llo_original>
